<compile_context>
chip_gen: v7x
topology: tpu7x:2x2x1
jax: 0.10.0
libtpu: 0.0.40
codegen_flags: <defaults>
</compile_context>

<pallas_src>
import math
import jax
import jax.numpy as jnp
from jax import lax
from jax.experimental import pallas as pl
from jax.experimental.pallas import tpu as pltpu

BN_EPS = 1e-5
NEG_FILL = -1e9          # matches masked_fill value in the PyTorch module
VERY_NEG = -3.0e38       # fill value for the segmented max scan
LANES = 128


def _make_kernel(E, L, K, pad):
    """Kernel closure over the static problem sizes."""

    def kernel(x_ref, mask_ref, pos_ref,
               w1_ref, b1_ref, w2_ref, b2_ref,
               sel_ref, selfirst_ref,
               wlin_ref, blin_ref, wout_ref, bout_ref,
               out_ref):
        # x_ref:    (E, N)      N = Bc*L, batch folded onto lanes
        # mask_ref: (1, N)      1.0 = keep, 0.0 = padded position
        # pos_ref:  (1, N)      position within its length-L segment (float)
        # w1/w2:    (E, K*E)    conv taps concatenated along contraction axis
        # b1/b2:    (E, 1)
        # sel:      (N, Bc)     lane -> batch membership (segmented sums)
        # selfirst: (N, Bc)     one-hot at each segment's first lane
        # wlin:     (H, 2E)  blin: (H, 1)
        # wout:     (OUT, H) bout: (OUT, 1)   (BatchNorm already folded in)
        # out_ref:  (1, OUT, Bc)
        x = x_ref[...]
        pos = pos_ref[...]
        N = x.shape[1]

        def im2col(v):
            # [E, N] -> [K*E, N]; row (dk*E + e, c) = v[e, c + dk - pad],
            # zero outside each length-L batch segment (conv zero padding).
            zp = jnp.zeros((v.shape[0], pad), jnp.float32)
            vp = jnp.concatenate([zp, v, zp], axis=1)          # [E, N + 2*pad]
            cols = []
            for dk in range(K):
                sh = vp[:, dk:dk + N]                          # source c + dk - pad
                valid = (pos >= float(pad - dk)) & (pos < float(L + pad - dk))
                cols.append(jnp.where(valid, sh, 0.0))
            return jnp.concatenate(cols, axis=0)               # [K*E, N]

        def seg_max(v):
            # Exact per-segment max, broadcast back over the segment's lanes.
            # Doubling ±shift scan, clipped at segment boundaries via `pos`.
            m = v
            s = 1
            while s < L:
                fill = jnp.full((v.shape[0], s), VERY_NEG, jnp.float32)
                up = jnp.concatenate([m[:, s:], fill], axis=1)   # value at c + s
                dn = jnp.concatenate([fill, m[:, :-s]], axis=1)  # value at c - s
                m = jnp.maximum(m, jnp.where(pos < float(L - s), up, VERY_NEG))
                m = jnp.maximum(m, jnp.where(pos >= float(s), dn, VERY_NEG))
                s *= 2
            return m

        # ---- conv1(x): one fused im2col matmul (contraction depth K*E) ----
        o = jnp.dot(w1_ref[...], im2col(x),
                    preferred_element_type=jnp.float32) + b1_ref[...]
        # self.dropout -> identity (inference mode)

        # ---- attend(x * o): second fused im2col matmul ----
        att = jnp.dot(w2_ref[...], im2col(x * o),
                      preferred_element_type=jnp.float32) + b2_ref[...]

        # ---- masked softmax per length-L segment + pooled features ----
        att = jnp.where(mask_ref[...] > 0.0, att, jnp.float32(NEG_FILL))
        p = jnp.exp(att - seg_max(att))                        # masked lanes -> 0
        num = jnp.dot(o * p, sel_ref[...], preferred_element_type=jnp.float32)
        den = jnp.dot(p, sel_ref[...], preferred_element_type=jnp.float32)
        o1 = num / den                                         # [E, Bc]
        o2 = jnp.dot(seg_max(o), selfirst_ref[...],
                     preferred_element_type=jnp.float32)       # [E, Bc] (max pool)
        feat = jnp.concatenate([o1, o2], axis=0)               # [2E, Bc]

        # ---- Linear(2E,32) -> Dropout(id) -> ReLU -> (BN folded into output) ----
        h = jnp.dot(wlin_ref[...], feat,
                    preferred_element_type=jnp.float32) + blin_ref[...]
        h = jnp.maximum(h, 0.0)
        out_ref[0] = jnp.dot(wout_ref[...], h,
                             preferred_element_type=jnp.float32) + bout_ref[...]

    return kernel


def attention3_forward(x, mask, sequence_lengths, frequencies, params):
    """x: [B, E, L] f32, mask: [B, L] bool. sequence_lengths / frequencies
    are accepted for API parity with the PyTorch forward but are unused."""
    del sequence_lengths, frequencies
    B, E, L = x.shape
    K = params["w1"].shape[-1]
    pad = K // 2
    H = params["wlin"].shape[0]
    OUT = params["wout"].shape[0]

    # Batch chunking: fold Bc batch rows onto the lane axis (Bc*L lanes/step).
    Bc = max(1, -(-LANES // L))
    if (Bc * L) % LANES != 0:
        Bc = B                      # fallback: single chunk, full-extent block
    n_chunks = -(-B // Bc)
    Bp = n_chunks * Bc
    N = Bc * L

    xf = x.astype(jnp.float32)
    maskf = mask.astype(jnp.float32)
    if Bp != B:
        xf = jnp.pad(xf, ((0, Bp - B), (0, 0), (0, 0)))
        maskf = jnp.pad(maskf, ((0, Bp - B), (0, 0)))

    # [E, Bp*L]: channels on sublanes, (batch, position) on lanes.
    x2d = xf.transpose(1, 0, 2).reshape(E, Bp * L)
    mask2d = maskf.reshape(1, Bp * L)
    pos2d = jnp.tile(jnp.arange(L, dtype=jnp.float32), Bp).reshape(1, Bp * L)

    # Per-chunk lane -> batch selectors (segmented reductions via the MXU).
    lane = jnp.arange(N)
    sel = (lane[:, None] // L == jnp.arange(Bc)[None, :]).astype(jnp.float32)
    sel_first = (lane[:, None] == (jnp.arange(Bc) * L)[None, :]).astype(jnp.float32)

    # Conv taps concatenated along the contraction axis: [E, K*E].
    w1c = params["w1"].transpose(0, 2, 1).reshape(E, K * E).astype(jnp.float32)
    w2c = params["w2"].transpose(0, 2, 1).reshape(E, K * E).astype(jnp.float32)
    col = lambda v: v.astype(jnp.float32)[:, None]             # [M] -> [M, 1]

    # Eval-mode BatchNorm folded into the output Linear (exact constant fold).
    a = params["gamma"] / jnp.sqrt(params["rvar"] + BN_EPS)
    c = params["beta"] - a * params["rmean"]
    wout2 = (params["wout"] * a[None, :]).astype(jnp.float32)
    bout2 = (params["bout"] + params["wout"] @ c).astype(jnp.float32)

    kernel = _make_kernel(E, L, K, pad)

    def full(shape):
        return pl.BlockSpec(shape, lambda i, _n=len(shape): (0,) * _n)

    def chunk2(rows):
        return pl.BlockSpec((rows, N), lambda i: (0, i))

    in_specs = [
        chunk2(E),                        # x2d
        chunk2(1),                        # mask
        chunk2(1),                        # pos
        full((E, K * E)), full((E, 1)),   # conv1
        full((E, K * E)), full((E, 1)),   # attend
        full((N, Bc)), full((N, Bc)),     # segment selectors
        full((H, 2 * E)), full((H, 1)),   # linear
        full((OUT, H)), full((OUT, 1)),   # output linear (BN folded)
    ]
    out_specs = pl.BlockSpec((1, OUT, Bc), lambda i: (i, 0, 0))

    out = pl.pallas_call(
        kernel,
        out_shape=jax.ShapeDtypeStruct((n_chunks, OUT, Bc), jnp.float32),
        grid=(n_chunks,),
        in_specs=in_specs,
        out_specs=out_specs,
        compiler_params=pltpu.CompilerParams(
            dimension_semantics=("parallel",)),
    )(x2d, mask2d, pos2d,
      w1c, col(params["b1"]), w2c, col(params["b2"]),
      sel, sel_first,
      params["wlin"].astype(jnp.float32), col(params["blin"]),
      wout2, col(bout2))

    # [n_chunks, OUT, Bc] -> [Bp, OUT] -> [B, OUT]
    return out.transpose(0, 2, 1).reshape(Bp, OUT)[:B]


def reference_forward(x, mask, p):
    """Pure-JAX reference (uses lax.conv) for cross-checking the kernel."""
    dn = ("NCH", "OIH", "NCH")
    pad = p["w1"].shape[-1] // 2
    o = lax.conv_general_dilated(x, p["w1"], (1,), [(pad, pad)],
                                 dimension_numbers=dn) + p["b1"][None, :, None]
    att = lax.conv_general_dilated(x * o, p["w2"], (1,), [(pad, pad)],
                                   dimension_numbers=dn) + p["b2"][None, :, None]
    att = jnp.where(mask[:, None, :], att, NEG_FILL)
    sm = jax.nn.softmax(att, axis=-1)
    o1 = jnp.sum(o * sm, axis=-1)
    o2 = jnp.max(o, axis=-1)
    f = jnp.concatenate([o1, o2], axis=-1)
    h = f @ p["wlin"].T + p["blin"]
    h = jnp.maximum(h, 0.0)
    h = p["gamma"] * (h - p["rmean"]) / jnp.sqrt(p["rvar"] + BN_EPS) + p["beta"]
    return h @ p["wout"].T + p["bout"]


def init_params(key, E, K, H, OUT):
    ks = jax.random.split(key, 8)
    u = lambda k, shape, s: jax.random.uniform(k, shape, jnp.float32, -s, s)
    s_conv = 1.0 / math.sqrt(E * K)
    s_lin = 1.0 / math.sqrt(2 * E)
    s_out = 1.0 / math.sqrt(H)
    return {
        "w1": u(ks[0], (E, E, K), s_conv), "b1": u(ks[1], (E,), s_conv),
        "w2": u(ks[2], (E, E, K), s_conv), "b2": u(ks[3], (E,), s_conv),
        "wlin": u(ks[4], (H, 2 * E), s_lin), "blin": u(ks[5], (H,), s_lin),
        "gamma": jnp.ones((H,), jnp.float32), "beta": jnp.zeros((H,), jnp.float32),
        "rmean": jnp.zeros((H,), jnp.float32), "rvar": jnp.ones((H,), jnp.float32),
        "wout": u(ks[6], (OUT, H), s_out), "bout": u(ks[7], (OUT,), s_out),
    }


if __name__ == "__main__":
    B, E, L, K, H, OUT = 2, 32, 16, 7, 32, 11
    key = jax.random.PRNGKey(0)
    kx, kp = jax.random.split(key, 2)

    x = jax.random.normal(kx, (B, E, L), jnp.float32)
    sequence_lengths = jnp.array([L, 10], dtype=jnp.int32)
    mask = jnp.arange(L)[None, :] < sequence_lengths[:, None]   # [B, L] bool
    frequencies = jnp.ones((B, L), jnp.float32)                 # unused in forward
    params = init_params(kp, E, K, H, OUT)

    out = attention3_forward(x, mask, sequence_lengths, frequencies, params)
    out = jax.block_until_ready(out)

    ref = reference_forward(x, mask, params)
    if not jnp.allclose(out, ref, rtol=2e-2, atol=2e-2):
        raise AssertionError(f"kernel/reference mismatch:\n{out}\n{ref}")
    print("KERNEL_OK")
</pallas_src>

<mosaic_0001>
module attributes {stable_mosaic.version = 11 : i64} {
  func.func @kernel(%arg0: i32, %arg1: memref<32x128xf32, #tpu.memory_space<vmem>>, %arg2: memref<1x128xf32, #tpu.memory_space<vmem>>, %arg3: memref<1x128xf32, #tpu.memory_space<vmem>>, %arg4: memref<32x224xf32, #tpu.memory_space<vmem>>, %arg5: memref<32x1xf32, #tpu.memory_space<vmem>>, %arg6: memref<32x224xf32, #tpu.memory_space<vmem>>, %arg7: memref<32x1xf32, #tpu.memory_space<vmem>>, %arg8: memref<128x8xf32, #tpu.memory_space<vmem>>, %arg9: memref<128x8xf32, #tpu.memory_space<vmem>>, %arg10: memref<32x64xf32, #tpu.memory_space<vmem>>, %arg11: memref<32x1xf32, #tpu.memory_space<vmem>>, %arg12: memref<11x32xf32, #tpu.memory_space<vmem>>, %arg13: memref<11x1xf32, #tpu.memory_space<vmem>>, %arg14: memref<1x11x8xf32, #tpu.memory_space<vmem>>) attributes {dimension_semantics = [#tpu.dimension_semantics<parallel>], iteration_bounds = array<i64: 1>, scalar_prefetch = 0 : i64, scratch_operands = 0 : i64, tpu.core_type = #tpu.core_type<tc>, window_params = [{transform_indices = @transform_0, window_bounds = array<i64: 32, 128>}, {transform_indices = @transform_1, window_bounds = array<i64: 1, 128>}, {transform_indices = @transform_2, window_bounds = array<i64: 1, 128>}, {pipeline_mode = #tpu.pipeline_mode<synchronous>, transform_indices = @transform_3, window_bounds = array<i64: 32, 224>}, {pipeline_mode = #tpu.pipeline_mode<synchronous>, transform_indices = @transform_4, window_bounds = array<i64: 32, 1>}, {pipeline_mode = #tpu.pipeline_mode<synchronous>, transform_indices = @transform_5, window_bounds = array<i64: 32, 224>}, {pipeline_mode = #tpu.pipeline_mode<synchronous>, transform_indices = @transform_6, window_bounds = array<i64: 32, 1>}, {pipeline_mode = #tpu.pipeline_mode<synchronous>, transform_indices = @transform_7, window_bounds = array<i64: 128, 8>}, {pipeline_mode = #tpu.pipeline_mode<synchronous>, transform_indices = @transform_8, window_bounds = array<i64: 128, 8>}, {pipeline_mode = #tpu.pipeline_mode<synchronous>, transform_indices = @transform_9, window_bounds = array<i64: 32, 64>}, {pipeline_mode = #tpu.pipeline_mode<synchronous>, transform_indices = @transform_10, window_bounds = array<i64: 32, 1>}, {pipeline_mode = #tpu.pipeline_mode<synchronous>, transform_indices = @transform_11, window_bounds = array<i64: 11, 32>}, {pipeline_mode = #tpu.pipeline_mode<synchronous>, transform_indices = @transform_12, window_bounds = array<i64: 11, 1>}, {transform_indices = @transform_13, window_bounds = array<i64: 1, 11, 8>}]} {
    %c0 = arith.constant 0 : index
    %c0_0 = arith.constant 0 : index
    %0 = vector.load %arg1[%c0, %c0_0] : memref<32x128xf32, #tpu.memory_space<vmem>>, vector<32x128xf32>
    %c0_1 = arith.constant 0 : index
    %c0_2 = arith.constant 0 : index
    %1 = vector.load %arg3[%c0_1, %c0_2] : memref<1x128xf32, #tpu.memory_space<vmem>>, vector<1x128xf32>
    %c0_3 = arith.constant 0 : index
    %c0_4 = arith.constant 0 : index
    %2 = vector.load %arg4[%c0_3, %c0_4] : memref<32x224xf32, #tpu.memory_space<vmem>>, vector<32x224xf32>
    %cst = arith.constant 0.000000e+00 : f32
    %3 = vector.broadcast %cst : f32 to vector<32x3xf32>
    %4 = tpu.concatenate %3, %0, %3 in 1 : vector<32x3xf32>, vector<32x128xf32>, vector<32x3xf32> -> vector<32x134xf32>
    %5 = vector.extract_strided_slice %4 {offsets = [0, 0], sizes = [32, 128], strides = [1, 1]} : vector<32x134xf32> to vector<32x128xf32>
    %cst_5 = arith.constant 3.000000e+00 : f32
    %6 = vector.broadcast %cst_5 : f32 to vector<1x128xf32>
    %7 = arith.cmpf oge, %1, %6 : vector<1x128xf32>
    %cst_6 = arith.constant 1.900000e+01 : f32
    %8 = vector.broadcast %cst_6 : f32 to vector<1x128xf32>
    %9 = arith.cmpf olt, %1, %8 : vector<1x128xf32>
    %10 = arith.andi %7, %9 : vector<1x128xi1>
    %cst_7 = arith.constant 0.000000e+00 : f32
    %11 = vector.shape_cast %10 : vector<1x128xi1> to vector<1x128xi1>
    %12 = vector.broadcast %11 : vector<1x128xi1> to vector<32x128xi1>
    %13 = vector.broadcast %cst_7 : f32 to vector<32x128xf32>
    %14 = arith.select %12, %5, %13 : vector<32x128xi1>, vector<32x128xf32>
    %15 = vector.extract_strided_slice %4 {offsets = [0, 1], sizes = [32, 128], strides = [1, 1]} : vector<32x134xf32> to vector<32x128xf32>
    %cst_8 = arith.constant 2.000000e+00 : f32
    %16 = vector.broadcast %cst_8 : f32 to vector<1x128xf32>
    %17 = arith.cmpf oge, %1, %16 : vector<1x128xf32>
    %cst_9 = arith.constant 1.800000e+01 : f32
    %18 = vector.broadcast %cst_9 : f32 to vector<1x128xf32>
    %19 = arith.cmpf olt, %1, %18 : vector<1x128xf32>
    %20 = arith.andi %17, %19 : vector<1x128xi1>
    %cst_10 = arith.constant 0.000000e+00 : f32
    %21 = vector.shape_cast %20 : vector<1x128xi1> to vector<1x128xi1>
    %22 = vector.broadcast %21 : vector<1x128xi1> to vector<32x128xi1>
    %23 = vector.broadcast %cst_10 : f32 to vector<32x128xf32>
    %24 = arith.select %22, %15, %23 : vector<32x128xi1>, vector<32x128xf32>
    %25 = vector.extract_strided_slice %4 {offsets = [0, 2], sizes = [32, 128], strides = [1, 1]} : vector<32x134xf32> to vector<32x128xf32>
    %cst_11 = arith.constant 1.000000e+00 : f32
    %26 = vector.broadcast %cst_11 : f32 to vector<1x128xf32>
    %27 = arith.cmpf oge, %1, %26 : vector<1x128xf32>
    %cst_12 = arith.constant 1.700000e+01 : f32
    %28 = vector.broadcast %cst_12 : f32 to vector<1x128xf32>
    %29 = arith.cmpf olt, %1, %28 : vector<1x128xf32>
    %30 = arith.andi %27, %29 : vector<1x128xi1>
    %cst_13 = arith.constant 0.000000e+00 : f32
    %31 = vector.shape_cast %30 : vector<1x128xi1> to vector<1x128xi1>
    %32 = vector.broadcast %31 : vector<1x128xi1> to vector<32x128xi1>
    %33 = vector.broadcast %cst_13 : f32 to vector<32x128xf32>
    %34 = arith.select %32, %25, %33 : vector<32x128xi1>, vector<32x128xf32>
    %35 = vector.extract_strided_slice %4 {offsets = [0, 3], sizes = [32, 128], strides = [1, 1]} : vector<32x134xf32> to vector<32x128xf32>
    %cst_14 = arith.constant 0.000000e+00 : f32
    %36 = vector.broadcast %cst_14 : f32 to vector<1x128xf32>
    %37 = arith.cmpf oge, %1, %36 : vector<1x128xf32>
    %cst_15 = arith.constant 1.600000e+01 : f32
    %38 = vector.broadcast %cst_15 : f32 to vector<1x128xf32>
    %39 = arith.cmpf olt, %1, %38 : vector<1x128xf32>
    %40 = arith.andi %37, %39 : vector<1x128xi1>
    %cst_16 = arith.constant 0.000000e+00 : f32
    %41 = vector.shape_cast %40 : vector<1x128xi1> to vector<1x128xi1>
    %42 = vector.broadcast %41 : vector<1x128xi1> to vector<32x128xi1>
    %43 = vector.broadcast %cst_16 : f32 to vector<32x128xf32>
    %44 = arith.select %42, %35, %43 : vector<32x128xi1>, vector<32x128xf32>
    %45 = vector.extract_strided_slice %4 {offsets = [0, 4], sizes = [32, 128], strides = [1, 1]} : vector<32x134xf32> to vector<32x128xf32>
    %cst_17 = arith.constant -1.000000e+00 : f32
    %46 = vector.broadcast %cst_17 : f32 to vector<1x128xf32>
    %47 = arith.cmpf oge, %1, %46 : vector<1x128xf32>
    %cst_18 = arith.constant 1.500000e+01 : f32
    %48 = vector.broadcast %cst_18 : f32 to vector<1x128xf32>
    %49 = arith.cmpf olt, %1, %48 : vector<1x128xf32>
    %50 = arith.andi %47, %49 : vector<1x128xi1>
    %cst_19 = arith.constant 0.000000e+00 : f32
    %51 = vector.shape_cast %50 : vector<1x128xi1> to vector<1x128xi1>
    %52 = vector.broadcast %51 : vector<1x128xi1> to vector<32x128xi1>
    %53 = vector.broadcast %cst_19 : f32 to vector<32x128xf32>
    %54 = arith.select %52, %45, %53 : vector<32x128xi1>, vector<32x128xf32>
    %55 = vector.extract_strided_slice %4 {offsets = [0, 5], sizes = [32, 128], strides = [1, 1]} : vector<32x134xf32> to vector<32x128xf32>
    %cst_20 = arith.constant -2.000000e+00 : f32
    %56 = vector.broadcast %cst_20 : f32 to vector<1x128xf32>
    %57 = arith.cmpf oge, %1, %56 : vector<1x128xf32>
    %cst_21 = arith.constant 1.400000e+01 : f32
    %58 = vector.broadcast %cst_21 : f32 to vector<1x128xf32>
    %59 = arith.cmpf olt, %1, %58 : vector<1x128xf32>
    %60 = arith.andi %57, %59 : vector<1x128xi1>
    %cst_22 = arith.constant 0.000000e+00 : f32
    %61 = vector.shape_cast %60 : vector<1x128xi1> to vector<1x128xi1>
    %62 = vector.broadcast %61 : vector<1x128xi1> to vector<32x128xi1>
    %63 = vector.broadcast %cst_22 : f32 to vector<32x128xf32>
    %64 = arith.select %62, %55, %63 : vector<32x128xi1>, vector<32x128xf32>
    %65 = vector.extract_strided_slice %4 {offsets = [0, 6], sizes = [32, 128], strides = [1, 1]} : vector<32x134xf32> to vector<32x128xf32>
    %cst_23 = arith.constant -3.000000e+00 : f32
    %66 = vector.broadcast %cst_23 : f32 to vector<1x128xf32>
    %67 = arith.cmpf oge, %1, %66 : vector<1x128xf32>
    %cst_24 = arith.constant 1.300000e+01 : f32
    %68 = vector.broadcast %cst_24 : f32 to vector<1x128xf32>
    %69 = arith.cmpf olt, %1, %68 : vector<1x128xf32>
    %70 = arith.andi %67, %69 : vector<1x128xi1>
    %cst_25 = arith.constant 0.000000e+00 : f32
    %71 = vector.shape_cast %70 : vector<1x128xi1> to vector<1x128xi1>
    %72 = vector.broadcast %71 : vector<1x128xi1> to vector<32x128xi1>
    %73 = vector.broadcast %cst_25 : f32 to vector<32x128xf32>
    %74 = arith.select %72, %65, %73 : vector<32x128xi1>, vector<32x128xf32>
    %75 = tpu.concatenate %14, %24, %34, %44, %54, %64, %74 in 0 : vector<32x128xf32>, vector<32x128xf32>, vector<32x128xf32>, vector<32x128xf32>, vector<32x128xf32>, vector<32x128xf32>, vector<32x128xf32> -> vector<224x128xf32>
    %cst_26 = arith.constant dense<0.000000e+00> : vector<32x128xf32>
    %76 = tpu.matmul %2, %75, %cst_26 {dimension_numbers = #tpu.dot_dimension_numbers<[1], [0], [0], [1], [0, 0, 1, 1], [], []>} : vector<32x224xf32>, vector<224x128xf32>, vector<32x128xf32> -> vector<32x128xf32>
    %c0_27 = arith.constant 0 : index
    %c0_28 = arith.constant 0 : index
    %77 = vector.load %arg5[%c0_27, %c0_28] : memref<32x1xf32, #tpu.memory_space<vmem>>, vector<32x1xf32>
    %78 = vector.broadcast %77 : vector<32x1xf32> to vector<32x128xf32>
    %79 = arith.addf %76, %78 : vector<32x128xf32>
    %c0_29 = arith.constant 0 : index
    %c0_30 = arith.constant 0 : index
    %80 = vector.load %arg6[%c0_29, %c0_30] : memref<32x224xf32, #tpu.memory_space<vmem>>, vector<32x224xf32>
    %81 = arith.mulf %0, %79 : vector<32x128xf32>
    %cst_31 = arith.constant 0.000000e+00 : f32
    %82 = vector.broadcast %cst_31 : f32 to vector<32x3xf32>
    %83 = tpu.concatenate %82, %81, %82 in 1 : vector<32x3xf32>, vector<32x128xf32>, vector<32x3xf32> -> vector<32x134xf32>
    %84 = vector.extract_strided_slice %83 {offsets = [0, 0], sizes = [32, 128], strides = [1, 1]} : vector<32x134xf32> to vector<32x128xf32>
    %cst_32 = arith.constant 3.000000e+00 : f32
    %85 = vector.broadcast %cst_32 : f32 to vector<1x128xf32>
    %86 = arith.cmpf oge, %1, %85 : vector<1x128xf32>
    %cst_33 = arith.constant 1.900000e+01 : f32
    %87 = vector.broadcast %cst_33 : f32 to vector<1x128xf32>
    %88 = arith.cmpf olt, %1, %87 : vector<1x128xf32>
    %89 = arith.andi %86, %88 : vector<1x128xi1>
    %cst_34 = arith.constant 0.000000e+00 : f32
    %90 = vector.shape_cast %89 : vector<1x128xi1> to vector<1x128xi1>
    %91 = vector.broadcast %90 : vector<1x128xi1> to vector<32x128xi1>
    %92 = vector.broadcast %cst_34 : f32 to vector<32x128xf32>
    %93 = arith.select %91, %84, %92 : vector<32x128xi1>, vector<32x128xf32>
    %94 = vector.extract_strided_slice %83 {offsets = [0, 1], sizes = [32, 128], strides = [1, 1]} : vector<32x134xf32> to vector<32x128xf32>
    %cst_35 = arith.constant 2.000000e+00 : f32
    %95 = vector.broadcast %cst_35 : f32 to vector<1x128xf32>
    %96 = arith.cmpf oge, %1, %95 : vector<1x128xf32>
    %cst_36 = arith.constant 1.800000e+01 : f32
    %97 = vector.broadcast %cst_36 : f32 to vector<1x128xf32>
    %98 = arith.cmpf olt, %1, %97 : vector<1x128xf32>
    %99 = arith.andi %96, %98 : vector<1x128xi1>
    %cst_37 = arith.constant 0.000000e+00 : f32
    %100 = vector.shape_cast %99 : vector<1x128xi1> to vector<1x128xi1>
    %101 = vector.broadcast %100 : vector<1x128xi1> to vector<32x128xi1>
    %102 = vector.broadcast %cst_37 : f32 to vector<32x128xf32>
    %103 = arith.select %101, %94, %102 : vector<32x128xi1>, vector<32x128xf32>
    %104 = vector.extract_strided_slice %83 {offsets = [0, 2], sizes = [32, 128], strides = [1, 1]} : vector<32x134xf32> to vector<32x128xf32>
    %cst_38 = arith.constant 1.000000e+00 : f32
    %105 = vector.broadcast %cst_38 : f32 to vector<1x128xf32>
    %106 = arith.cmpf oge, %1, %105 : vector<1x128xf32>
    %cst_39 = arith.constant 1.700000e+01 : f32
    %107 = vector.broadcast %cst_39 : f32 to vector<1x128xf32>
    %108 = arith.cmpf olt, %1, %107 : vector<1x128xf32>
    %109 = arith.andi %106, %108 : vector<1x128xi1>
    %cst_40 = arith.constant 0.000000e+00 : f32
    %110 = vector.shape_cast %109 : vector<1x128xi1> to vector<1x128xi1>
    %111 = vector.broadcast %110 : vector<1x128xi1> to vector<32x128xi1>
    %112 = vector.broadcast %cst_40 : f32 to vector<32x128xf32>
    %113 = arith.select %111, %104, %112 : vector<32x128xi1>, vector<32x128xf32>
    %114 = vector.extract_strided_slice %83 {offsets = [0, 3], sizes = [32, 128], strides = [1, 1]} : vector<32x134xf32> to vector<32x128xf32>
    %cst_41 = arith.constant 0.000000e+00 : f32
    %115 = vector.broadcast %cst_41 : f32 to vector<1x128xf32>
    %116 = arith.cmpf oge, %1, %115 : vector<1x128xf32>
    %cst_42 = arith.constant 1.600000e+01 : f32
    %117 = vector.broadcast %cst_42 : f32 to vector<1x128xf32>
    %118 = arith.cmpf olt, %1, %117 : vector<1x128xf32>
    %119 = arith.andi %116, %118 : vector<1x128xi1>
    %cst_43 = arith.constant 0.000000e+00 : f32
    %120 = vector.shape_cast %119 : vector<1x128xi1> to vector<1x128xi1>
    %121 = vector.broadcast %120 : vector<1x128xi1> to vector<32x128xi1>
    %122 = vector.broadcast %cst_43 : f32 to vector<32x128xf32>
    %123 = arith.select %121, %114, %122 : vector<32x128xi1>, vector<32x128xf32>
    %124 = vector.extract_strided_slice %83 {offsets = [0, 4], sizes = [32, 128], strides = [1, 1]} : vector<32x134xf32> to vector<32x128xf32>
    %cst_44 = arith.constant -1.000000e+00 : f32
    %125 = vector.broadcast %cst_44 : f32 to vector<1x128xf32>
    %126 = arith.cmpf oge, %1, %125 : vector<1x128xf32>
    %cst_45 = arith.constant 1.500000e+01 : f32
    %127 = vector.broadcast %cst_45 : f32 to vector<1x128xf32>
    %128 = arith.cmpf olt, %1, %127 : vector<1x128xf32>
    %129 = arith.andi %126, %128 : vector<1x128xi1>
    %cst_46 = arith.constant 0.000000e+00 : f32
    %130 = vector.shape_cast %129 : vector<1x128xi1> to vector<1x128xi1>
    %131 = vector.broadcast %130 : vector<1x128xi1> to vector<32x128xi1>
    %132 = vector.broadcast %cst_46 : f32 to vector<32x128xf32>
    %133 = arith.select %131, %124, %132 : vector<32x128xi1>, vector<32x128xf32>
    %134 = vector.extract_strided_slice %83 {offsets = [0, 5], sizes = [32, 128], strides = [1, 1]} : vector<32x134xf32> to vector<32x128xf32>
    %cst_47 = arith.constant -2.000000e+00 : f32
    %135 = vector.broadcast %cst_47 : f32 to vector<1x128xf32>
    %136 = arith.cmpf oge, %1, %135 : vector<1x128xf32>
    %cst_48 = arith.constant 1.400000e+01 : f32
    %137 = vector.broadcast %cst_48 : f32 to vector<1x128xf32>
    %138 = arith.cmpf olt, %1, %137 : vector<1x128xf32>
    %139 = arith.andi %136, %138 : vector<1x128xi1>
    %cst_49 = arith.constant 0.000000e+00 : f32
    %140 = vector.shape_cast %139 : vector<1x128xi1> to vector<1x128xi1>
    %141 = vector.broadcast %140 : vector<1x128xi1> to vector<32x128xi1>
    %142 = vector.broadcast %cst_49 : f32 to vector<32x128xf32>
    %143 = arith.select %141, %134, %142 : vector<32x128xi1>, vector<32x128xf32>
    %144 = vector.extract_strided_slice %83 {offsets = [0, 6], sizes = [32, 128], strides = [1, 1]} : vector<32x134xf32> to vector<32x128xf32>
    %cst_50 = arith.constant -3.000000e+00 : f32
    %145 = vector.broadcast %cst_50 : f32 to vector<1x128xf32>
    %146 = arith.cmpf oge, %1, %145 : vector<1x128xf32>
    %cst_51 = arith.constant 1.300000e+01 : f32
    %147 = vector.broadcast %cst_51 : f32 to vector<1x128xf32>
    %148 = arith.cmpf olt, %1, %147 : vector<1x128xf32>
    %149 = arith.andi %146, %148 : vector<1x128xi1>
    %cst_52 = arith.constant 0.000000e+00 : f32
    %150 = vector.shape_cast %149 : vector<1x128xi1> to vector<1x128xi1>
    %151 = vector.broadcast %150 : vector<1x128xi1> to vector<32x128xi1>
    %152 = vector.broadcast %cst_52 : f32 to vector<32x128xf32>
    %153 = arith.select %151, %144, %152 : vector<32x128xi1>, vector<32x128xf32>
    %154 = tpu.concatenate %93, %103, %113, %123, %133, %143, %153 in 0 : vector<32x128xf32>, vector<32x128xf32>, vector<32x128xf32>, vector<32x128xf32>, vector<32x128xf32>, vector<32x128xf32>, vector<32x128xf32> -> vector<224x128xf32>
    %cst_53 = arith.constant dense<0.000000e+00> : vector<32x128xf32>
    %155 = tpu.matmul %80, %154, %cst_53 {dimension_numbers = #tpu.dot_dimension_numbers<[1], [0], [0], [1], [0, 0, 1, 1], [], []>} : vector<32x224xf32>, vector<224x128xf32>, vector<32x128xf32> -> vector<32x128xf32>
    %c0_54 = arith.constant 0 : index
    %c0_55 = arith.constant 0 : index
    %156 = vector.load %arg7[%c0_54, %c0_55] : memref<32x1xf32, #tpu.memory_space<vmem>>, vector<32x1xf32>
    %157 = vector.broadcast %156 : vector<32x1xf32> to vector<32x128xf32>
    %158 = arith.addf %155, %157 : vector<32x128xf32>
    %c0_56 = arith.constant 0 : index
    %c0_57 = arith.constant 0 : index
    %159 = vector.load %arg2[%c0_56, %c0_57] : memref<1x128xf32, #tpu.memory_space<vmem>>, vector<1x128xf32>
    %cst_58 = arith.constant 0.000000e+00 : f32
    %160 = vector.broadcast %cst_58 : f32 to vector<1x128xf32>
    %161 = arith.cmpf ogt, %159, %160 : vector<1x128xf32>
    %cst_59 = arith.constant -1.000000e+09 : f32
    %162 = vector.shape_cast %161 : vector<1x128xi1> to vector<1x128xi1>
    %163 = vector.broadcast %162 : vector<1x128xi1> to vector<32x128xi1>
    %164 = vector.broadcast %cst_59 : f32 to vector<32x128xf32>
    %165 = arith.select %163, %158, %164 : vector<32x128xi1>, vector<32x128xf32>
    %cst_60 = arith.constant -3.000000e+38 : f32
    %166 = vector.broadcast %cst_60 : f32 to vector<32x1xf32>
    %167 = vector.extract_strided_slice %165 {offsets = [0, 1], sizes = [32, 127], strides = [1, 1]} : vector<32x128xf32> to vector<32x127xf32>
    %168 = tpu.concatenate %167, %166 in 1 : vector<32x127xf32>, vector<32x1xf32> -> vector<32x128xf32>
    %169 = vector.extract_strided_slice %165 {offsets = [0, 0], sizes = [32, 127], strides = [1, 1]} : vector<32x128xf32> to vector<32x127xf32>
    %170 = tpu.concatenate %166, %169 in 1 : vector<32x1xf32>, vector<32x127xf32> -> vector<32x128xf32>
    %cst_61 = arith.constant 1.500000e+01 : f32
    %171 = vector.broadcast %cst_61 : f32 to vector<1x128xf32>
    %172 = arith.cmpf olt, %1, %171 : vector<1x128xf32>
    %cst_62 = arith.constant -3.000000e+38 : f32
    %173 = vector.shape_cast %172 : vector<1x128xi1> to vector<1x128xi1>
    %174 = vector.broadcast %173 : vector<1x128xi1> to vector<32x128xi1>
    %175 = vector.broadcast %cst_62 : f32 to vector<32x128xf32>
    %176 = arith.select %174, %168, %175 : vector<32x128xi1>, vector<32x128xf32>
    %177 = arith.maximumf %165, %176 : vector<32x128xf32>
    %cst_63 = arith.constant 1.000000e+00 : f32
    %178 = vector.broadcast %cst_63 : f32 to vector<1x128xf32>
    %179 = arith.cmpf oge, %1, %178 : vector<1x128xf32>
    %cst_64 = arith.constant -3.000000e+38 : f32
    %180 = vector.shape_cast %179 : vector<1x128xi1> to vector<1x128xi1>
    %181 = vector.broadcast %180 : vector<1x128xi1> to vector<32x128xi1>
    %182 = vector.broadcast %cst_64 : f32 to vector<32x128xf32>
    %183 = arith.select %181, %170, %182 : vector<32x128xi1>, vector<32x128xf32>
    %184 = arith.maximumf %177, %183 : vector<32x128xf32>
    %cst_65 = arith.constant -3.000000e+38 : f32
    %185 = vector.broadcast %cst_65 : f32 to vector<32x2xf32>
    %186 = vector.extract_strided_slice %184 {offsets = [0, 2], sizes = [32, 126], strides = [1, 1]} : vector<32x128xf32> to vector<32x126xf32>
    %187 = tpu.concatenate %186, %185 in 1 : vector<32x126xf32>, vector<32x2xf32> -> vector<32x128xf32>
    %188 = vector.extract_strided_slice %184 {offsets = [0, 0], sizes = [32, 126], strides = [1, 1]} : vector<32x128xf32> to vector<32x126xf32>
    %189 = tpu.concatenate %185, %188 in 1 : vector<32x2xf32>, vector<32x126xf32> -> vector<32x128xf32>
    %cst_66 = arith.constant 1.400000e+01 : f32
    %190 = vector.broadcast %cst_66 : f32 to vector<1x128xf32>
    %191 = arith.cmpf olt, %1, %190 : vector<1x128xf32>
    %cst_67 = arith.constant -3.000000e+38 : f32
    %192 = vector.shape_cast %191 : vector<1x128xi1> to vector<1x128xi1>
    %193 = vector.broadcast %192 : vector<1x128xi1> to vector<32x128xi1>
    %194 = vector.broadcast %cst_67 : f32 to vector<32x128xf32>
    %195 = arith.select %193, %187, %194 : vector<32x128xi1>, vector<32x128xf32>
    %196 = arith.maximumf %184, %195 : vector<32x128xf32>
    %cst_68 = arith.constant 2.000000e+00 : f32
    %197 = vector.broadcast %cst_68 : f32 to vector<1x128xf32>
    %198 = arith.cmpf oge, %1, %197 : vector<1x128xf32>
    %cst_69 = arith.constant -3.000000e+38 : f32
    %199 = vector.shape_cast %198 : vector<1x128xi1> to vector<1x128xi1>
    %200 = vector.broadcast %199 : vector<1x128xi1> to vector<32x128xi1>
    %201 = vector.broadcast %cst_69 : f32 to vector<32x128xf32>
    %202 = arith.select %200, %189, %201 : vector<32x128xi1>, vector<32x128xf32>
    %203 = arith.maximumf %196, %202 : vector<32x128xf32>
    %cst_70 = arith.constant -3.000000e+38 : f32
    %204 = vector.broadcast %cst_70 : f32 to vector<32x4xf32>
    %205 = vector.extract_strided_slice %203 {offsets = [0, 4], sizes = [32, 124], strides = [1, 1]} : vector<32x128xf32> to vector<32x124xf32>
    %206 = tpu.concatenate %205, %204 in 1 : vector<32x124xf32>, vector<32x4xf32> -> vector<32x128xf32>
    %207 = vector.extract_strided_slice %203 {offsets = [0, 0], sizes = [32, 124], strides = [1, 1]} : vector<32x128xf32> to vector<32x124xf32>
    %208 = tpu.concatenate %204, %207 in 1 : vector<32x4xf32>, vector<32x124xf32> -> vector<32x128xf32>
    %cst_71 = arith.constant 1.200000e+01 : f32
    %209 = vector.broadcast %cst_71 : f32 to vector<1x128xf32>
    %210 = arith.cmpf olt, %1, %209 : vector<1x128xf32>
    %cst_72 = arith.constant -3.000000e+38 : f32
    %211 = vector.shape_cast %210 : vector<1x128xi1> to vector<1x128xi1>
    %212 = vector.broadcast %211 : vector<1x128xi1> to vector<32x128xi1>
    %213 = vector.broadcast %cst_72 : f32 to vector<32x128xf32>
    %214 = arith.select %212, %206, %213 : vector<32x128xi1>, vector<32x128xf32>
    %215 = arith.maximumf %203, %214 : vector<32x128xf32>
    %cst_73 = arith.constant 4.000000e+00 : f32
    %216 = vector.broadcast %cst_73 : f32 to vector<1x128xf32>
    %217 = arith.cmpf oge, %1, %216 : vector<1x128xf32>
    %cst_74 = arith.constant -3.000000e+38 : f32
    %218 = vector.shape_cast %217 : vector<1x128xi1> to vector<1x128xi1>
    %219 = vector.broadcast %218 : vector<1x128xi1> to vector<32x128xi1>
    %220 = vector.broadcast %cst_74 : f32 to vector<32x128xf32>
    %221 = arith.select %219, %208, %220 : vector<32x128xi1>, vector<32x128xf32>
    %222 = arith.maximumf %215, %221 : vector<32x128xf32>
    %cst_75 = arith.constant -3.000000e+38 : f32
    %223 = vector.broadcast %cst_75 : f32 to vector<32x8xf32>
    %224 = vector.extract_strided_slice %222 {offsets = [0, 8], sizes = [32, 120], strides = [1, 1]} : vector<32x128xf32> to vector<32x120xf32>
    %225 = tpu.concatenate %224, %223 in 1 : vector<32x120xf32>, vector<32x8xf32> -> vector<32x128xf32>
    %226 = vector.extract_strided_slice %222 {offsets = [0, 0], sizes = [32, 120], strides = [1, 1]} : vector<32x128xf32> to vector<32x120xf32>
    %227 = tpu.concatenate %223, %226 in 1 : vector<32x8xf32>, vector<32x120xf32> -> vector<32x128xf32>
    %cst_76 = arith.constant 8.000000e+00 : f32
    %228 = vector.broadcast %cst_76 : f32 to vector<1x128xf32>
    %229 = arith.cmpf olt, %1, %228 : vector<1x128xf32>
    %cst_77 = arith.constant -3.000000e+38 : f32
    %230 = vector.shape_cast %229 : vector<1x128xi1> to vector<1x128xi1>
    %231 = vector.broadcast %230 : vector<1x128xi1> to vector<32x128xi1>
    %232 = vector.broadcast %cst_77 : f32 to vector<32x128xf32>
    %233 = arith.select %231, %225, %232 : vector<32x128xi1>, vector<32x128xf32>
    %234 = arith.maximumf %222, %233 : vector<32x128xf32>
    %cst_78 = arith.constant 8.000000e+00 : f32
    %235 = vector.broadcast %cst_78 : f32 to vector<1x128xf32>
    %236 = arith.cmpf oge, %1, %235 : vector<1x128xf32>
    %cst_79 = arith.constant -3.000000e+38 : f32
    %237 = vector.shape_cast %236 : vector<1x128xi1> to vector<1x128xi1>
    %238 = vector.broadcast %237 : vector<1x128xi1> to vector<32x128xi1>
    %239 = vector.broadcast %cst_79 : f32 to vector<32x128xf32>
    %240 = arith.select %238, %227, %239 : vector<32x128xi1>, vector<32x128xf32>
    %241 = arith.maximumf %234, %240 : vector<32x128xf32>
    %242 = arith.subf %165, %241 : vector<32x128xf32>
    %243 = math.exp %242 : vector<32x128xf32>
    %244 = arith.mulf %79, %243 : vector<32x128xf32>
    %c0_80 = arith.constant 0 : index
    %c0_81 = arith.constant 0 : index
    %245 = vector.load %arg8[%c0_80, %c0_81] : memref<128x8xf32, #tpu.memory_space<vmem>>, vector<128x8xf32>
    %cst_82 = arith.constant dense<0.000000e+00> : vector<32x8xf32>
    %246 = tpu.matmul %244, %245, %cst_82 {dimension_numbers = #tpu.dot_dimension_numbers<[1], [0], [0], [1], [0, 0, 1, 1], [], []>} : vector<32x128xf32>, vector<128x8xf32>, vector<32x8xf32> -> vector<32x8xf32>
    %c0_83 = arith.constant 0 : index
    %c0_84 = arith.constant 0 : index
    %247 = vector.load %arg8[%c0_83, %c0_84] : memref<128x8xf32, #tpu.memory_space<vmem>>, vector<128x8xf32>
    %cst_85 = arith.constant dense<0.000000e+00> : vector<32x8xf32>
    %248 = tpu.matmul %243, %247, %cst_85 {dimension_numbers = #tpu.dot_dimension_numbers<[1], [0], [0], [1], [0, 0, 1, 1], [], []>} : vector<32x128xf32>, vector<128x8xf32>, vector<32x8xf32> -> vector<32x8xf32>
    %249 = arith.divf %246, %248 : vector<32x8xf32>
    %cst_86 = arith.constant -3.000000e+38 : f32
    %250 = vector.broadcast %cst_86 : f32 to vector<32x1xf32>
    %251 = vector.extract_strided_slice %79 {offsets = [0, 1], sizes = [32, 127], strides = [1, 1]} : vector<32x128xf32> to vector<32x127xf32>
    %252 = tpu.concatenate %251, %250 in 1 : vector<32x127xf32>, vector<32x1xf32> -> vector<32x128xf32>
    %253 = vector.extract_strided_slice %79 {offsets = [0, 0], sizes = [32, 127], strides = [1, 1]} : vector<32x128xf32> to vector<32x127xf32>
    %254 = tpu.concatenate %250, %253 in 1 : vector<32x1xf32>, vector<32x127xf32> -> vector<32x128xf32>
    %cst_87 = arith.constant 1.500000e+01 : f32
    %255 = vector.broadcast %cst_87 : f32 to vector<1x128xf32>
    %256 = arith.cmpf olt, %1, %255 : vector<1x128xf32>
    %cst_88 = arith.constant -3.000000e+38 : f32
    %257 = vector.shape_cast %256 : vector<1x128xi1> to vector<1x128xi1>
    %258 = vector.broadcast %257 : vector<1x128xi1> to vector<32x128xi1>
    %259 = vector.broadcast %cst_88 : f32 to vector<32x128xf32>
    %260 = arith.select %258, %252, %259 : vector<32x128xi1>, vector<32x128xf32>
    %261 = arith.maximumf %79, %260 : vector<32x128xf32>
    %cst_89 = arith.constant 1.000000e+00 : f32
    %262 = vector.broadcast %cst_89 : f32 to vector<1x128xf32>
    %263 = arith.cmpf oge, %1, %262 : vector<1x128xf32>
    %cst_90 = arith.constant -3.000000e+38 : f32
    %264 = vector.shape_cast %263 : vector<1x128xi1> to vector<1x128xi1>
    %265 = vector.broadcast %264 : vector<1x128xi1> to vector<32x128xi1>
    %266 = vector.broadcast %cst_90 : f32 to vector<32x128xf32>
    %267 = arith.select %265, %254, %266 : vector<32x128xi1>, vector<32x128xf32>
    %268 = arith.maximumf %261, %267 : vector<32x128xf32>
    %cst_91 = arith.constant -3.000000e+38 : f32
    %269 = vector.broadcast %cst_91 : f32 to vector<32x2xf32>
    %270 = vector.extract_strided_slice %268 {offsets = [0, 2], sizes = [32, 126], strides = [1, 1]} : vector<32x128xf32> to vector<32x126xf32>
    %271 = tpu.concatenate %270, %269 in 1 : vector<32x126xf32>, vector<32x2xf32> -> vector<32x128xf32>
    %272 = vector.extract_strided_slice %268 {offsets = [0, 0], sizes = [32, 126], strides = [1, 1]} : vector<32x128xf32> to vector<32x126xf32>
    %273 = tpu.concatenate %269, %272 in 1 : vector<32x2xf32>, vector<32x126xf32> -> vector<32x128xf32>
    %cst_92 = arith.constant 1.400000e+01 : f32
    %274 = vector.broadcast %cst_92 : f32 to vector<1x128xf32>
    %275 = arith.cmpf olt, %1, %274 : vector<1x128xf32>
    %cst_93 = arith.constant -3.000000e+38 : f32
    %276 = vector.shape_cast %275 : vector<1x128xi1> to vector<1x128xi1>
    %277 = vector.broadcast %276 : vector<1x128xi1> to vector<32x128xi1>
    %278 = vector.broadcast %cst_93 : f32 to vector<32x128xf32>
    %279 = arith.select %277, %271, %278 : vector<32x128xi1>, vector<32x128xf32>
    %280 = arith.maximumf %268, %279 : vector<32x128xf32>
    %cst_94 = arith.constant 2.000000e+00 : f32
    %281 = vector.broadcast %cst_94 : f32 to vector<1x128xf32>
    %282 = arith.cmpf oge, %1, %281 : vector<1x128xf32>
    %cst_95 = arith.constant -3.000000e+38 : f32
    %283 = vector.shape_cast %282 : vector<1x128xi1> to vector<1x128xi1>
    %284 = vector.broadcast %283 : vector<1x128xi1> to vector<32x128xi1>
    %285 = vector.broadcast %cst_95 : f32 to vector<32x128xf32>
    %286 = arith.select %284, %273, %285 : vector<32x128xi1>, vector<32x128xf32>
    %287 = arith.maximumf %280, %286 : vector<32x128xf32>
    %cst_96 = arith.constant -3.000000e+38 : f32
    %288 = vector.broadcast %cst_96 : f32 to vector<32x4xf32>
    %289 = vector.extract_strided_slice %287 {offsets = [0, 4], sizes = [32, 124], strides = [1, 1]} : vector<32x128xf32> to vector<32x124xf32>
    %290 = tpu.concatenate %289, %288 in 1 : vector<32x124xf32>, vector<32x4xf32> -> vector<32x128xf32>
    %291 = vector.extract_strided_slice %287 {offsets = [0, 0], sizes = [32, 124], strides = [1, 1]} : vector<32x128xf32> to vector<32x124xf32>
    %292 = tpu.concatenate %288, %291 in 1 : vector<32x4xf32>, vector<32x124xf32> -> vector<32x128xf32>
    %cst_97 = arith.constant 1.200000e+01 : f32
    %293 = vector.broadcast %cst_97 : f32 to vector<1x128xf32>
    %294 = arith.cmpf olt, %1, %293 : vector<1x128xf32>
    %cst_98 = arith.constant -3.000000e+38 : f32
    %295 = vector.shape_cast %294 : vector<1x128xi1> to vector<1x128xi1>
    %296 = vector.broadcast %295 : vector<1x128xi1> to vector<32x128xi1>
    %297 = vector.broadcast %cst_98 : f32 to vector<32x128xf32>
    %298 = arith.select %296, %290, %297 : vector<32x128xi1>, vector<32x128xf32>
    %299 = arith.maximumf %287, %298 : vector<32x128xf32>
    %cst_99 = arith.constant 4.000000e+00 : f32
    %300 = vector.broadcast %cst_99 : f32 to vector<1x128xf32>
    %301 = arith.cmpf oge, %1, %300 : vector<1x128xf32>
    %cst_100 = arith.constant -3.000000e+38 : f32
    %302 = vector.shape_cast %301 : vector<1x128xi1> to vector<1x128xi1>
    %303 = vector.broadcast %302 : vector<1x128xi1> to vector<32x128xi1>
    %304 = vector.broadcast %cst_100 : f32 to vector<32x128xf32>
    %305 = arith.select %303, %292, %304 : vector<32x128xi1>, vector<32x128xf32>
    %306 = arith.maximumf %299, %305 : vector<32x128xf32>
    %cst_101 = arith.constant -3.000000e+38 : f32
    %307 = vector.broadcast %cst_101 : f32 to vector<32x8xf32>
    %308 = vector.extract_strided_slice %306 {offsets = [0, 8], sizes = [32, 120], strides = [1, 1]} : vector<32x128xf32> to vector<32x120xf32>
    %309 = tpu.concatenate %308, %307 in 1 : vector<32x120xf32>, vector<32x8xf32> -> vector<32x128xf32>
    %310 = vector.extract_strided_slice %306 {offsets = [0, 0], sizes = [32, 120], strides = [1, 1]} : vector<32x128xf32> to vector<32x120xf32>
    %311 = tpu.concatenate %307, %310 in 1 : vector<32x8xf32>, vector<32x120xf32> -> vector<32x128xf32>
    %cst_102 = arith.constant 8.000000e+00 : f32
    %312 = vector.broadcast %cst_102 : f32 to vector<1x128xf32>
    %313 = arith.cmpf olt, %1, %312 : vector<1x128xf32>
    %cst_103 = arith.constant -3.000000e+38 : f32
    %314 = vector.shape_cast %313 : vector<1x128xi1> to vector<1x128xi1>
    %315 = vector.broadcast %314 : vector<1x128xi1> to vector<32x128xi1>
    %316 = vector.broadcast %cst_103 : f32 to vector<32x128xf32>
    %317 = arith.select %315, %309, %316 : vector<32x128xi1>, vector<32x128xf32>
    %318 = arith.maximumf %306, %317 : vector<32x128xf32>
    %cst_104 = arith.constant 8.000000e+00 : f32
    %319 = vector.broadcast %cst_104 : f32 to vector<1x128xf32>
    %320 = arith.cmpf oge, %1, %319 : vector<1x128xf32>
    %cst_105 = arith.constant -3.000000e+38 : f32
    %321 = vector.shape_cast %320 : vector<1x128xi1> to vector<1x128xi1>
    %322 = vector.broadcast %321 : vector<1x128xi1> to vector<32x128xi1>
    %323 = vector.broadcast %cst_105 : f32 to vector<32x128xf32>
    %324 = arith.select %322, %311, %323 : vector<32x128xi1>, vector<32x128xf32>
    %325 = arith.maximumf %318, %324 : vector<32x128xf32>
    %c0_106 = arith.constant 0 : index
    %c0_107 = arith.constant 0 : index
    %326 = vector.load %arg9[%c0_106, %c0_107] : memref<128x8xf32, #tpu.memory_space<vmem>>, vector<128x8xf32>
    %cst_108 = arith.constant dense<0.000000e+00> : vector<32x8xf32>
    %327 = tpu.matmul %325, %326, %cst_108 {dimension_numbers = #tpu.dot_dimension_numbers<[1], [0], [0], [1], [0, 0, 1, 1], [], []>} : vector<32x128xf32>, vector<128x8xf32>, vector<32x8xf32> -> vector<32x8xf32>
    %328 = tpu.concatenate %249, %327 in 0 : vector<32x8xf32>, vector<32x8xf32> -> vector<64x8xf32>
    %c0_109 = arith.constant 0 : index
    %c0_110 = arith.constant 0 : index
    %329 = vector.load %arg10[%c0_109, %c0_110] : memref<32x64xf32, #tpu.memory_space<vmem>>, vector<32x64xf32>
    %cst_111 = arith.constant dense<0.000000e+00> : vector<32x8xf32>
    %330 = tpu.matmul %329, %328, %cst_111 {dimension_numbers = #tpu.dot_dimension_numbers<[1], [0], [0], [1], [0, 0, 1, 1], [], []>} : vector<32x64xf32>, vector<64x8xf32>, vector<32x8xf32> -> vector<32x8xf32>
    %c0_112 = arith.constant 0 : index
    %c0_113 = arith.constant 0 : index
    %331 = vector.load %arg11[%c0_112, %c0_113] : memref<32x1xf32, #tpu.memory_space<vmem>>, vector<32x1xf32>
    %332 = vector.broadcast %331 : vector<32x1xf32> to vector<32x8xf32>
    %333 = arith.addf %330, %332 : vector<32x8xf32>
    %cst_114 = arith.constant 0.000000e+00 : f32
    %334 = vector.broadcast %cst_114 : f32 to vector<32x8xf32>
    %335 = arith.maximumf %333, %334 : vector<32x8xf32>
    %c0_115 = arith.constant 0 : index
    %c0_116 = arith.constant 0 : index
    %336 = vector.load %arg12[%c0_115, %c0_116] : memref<11x32xf32, #tpu.memory_space<vmem>>, vector<11x32xf32>
    %cst_117 = arith.constant dense<0.000000e+00> : vector<11x8xf32>
    %337 = tpu.matmul %336, %335, %cst_117 {dimension_numbers = #tpu.dot_dimension_numbers<[1], [0], [0], [1], [0, 0, 1, 1], [], []>} : vector<11x32xf32>, vector<32x8xf32>, vector<11x8xf32> -> vector<11x8xf32>
    %c0_118 = arith.constant 0 : index
    %c0_119 = arith.constant 0 : index
    %338 = vector.load %arg13[%c0_118, %c0_119] : memref<11x1xf32, #tpu.memory_space<vmem>>, vector<11x1xf32>
    %339 = vector.broadcast %338 : vector<11x1xf32> to vector<11x8xf32>
    %340 = arith.addf %337, %339 : vector<11x8xf32>
    %c0_120 = arith.constant 0 : index
    %c0_121 = arith.constant 0 : index
    %c0_122 = arith.constant 0 : index
    %341 = vector.load %arg14[%c0_120, %c0_121, %c0_122] : memref<1x11x8xf32, #tpu.memory_space<vmem>>, vector<1x11x8xf32>
    %342 = vector.shape_cast %341 : vector<1x11x8xf32> to vector<11x8xf32>
    %343 = vector.shape_cast %340 : vector<11x8xf32> to vector<1x11x8xf32>
    tpu.vector_store %arg14[%c0_120, %c0_121, %c0_122], %343 {strides = array<i32>} : memref<1x11x8xf32, #tpu.memory_space<vmem>>, vector<1x11x8xf32>,
    return
  }
  func.func @transform_0(%arg0: i32) -> (i32, i32) {
    %c0_i32 = arith.constant 0 : i32
    %c0_i32_0 = arith.constant 0 : i32
    return %c0_i32, %arg0 : i32, i32
  }
  func.func @transform_1(%arg0: i32) -> (i32, i32) {
    %c0_i32 = arith.constant 0 : i32
    %c0_i32_0 = arith.constant 0 : i32
    return %c0_i32, %arg0 : i32, i32
  }
  func.func @transform_2(%arg0: i32) -> (i32, i32) {
    %c0_i32 = arith.constant 0 : i32
    %c0_i32_0 = arith.constant 0 : i32
    return %c0_i32, %arg0 : i32, i32
  }
  func.func @transform_3(%arg0: i32) -> (i32, i32) {
    %c0_i32 = arith.constant 0 : i32
    %c0_i32_0 = arith.constant 0 : i32
    %c0_i32_1 = arith.constant 0 : i32
    return %c0_i32, %c0_i32_0 : i32, i32
  }
  func.func @transform_4(%arg0: i32) -> (i32, i32) {
    %c0_i32 = arith.constant 0 : i32
    %c0_i32_0 = arith.constant 0 : i32
    %c0_i32_1 = arith.constant 0 : i32
    return %c0_i32, %c0_i32_0 : i32, i32
  }
  func.func @transform_5(%arg0: i32) -> (i32, i32) {
    %c0_i32 = arith.constant 0 : i32
    %c0_i32_0 = arith.constant 0 : i32
    %c0_i32_1 = arith.constant 0 : i32
    return %c0_i32, %c0_i32_0 : i32, i32
  }
  func.func @transform_6(%arg0: i32) -> (i32, i32) {
    %c0_i32 = arith.constant 0 : i32
    %c0_i32_0 = arith.constant 0 : i32
    %c0_i32_1 = arith.constant 0 : i32
    return %c0_i32, %c0_i32_0 : i32, i32
  }
  func.func @transform_7(%arg0: i32) -> (i32, i32) {
    %c0_i32 = arith.constant 0 : i32
    %c0_i32_0 = arith.constant 0 : i32
    %c0_i32_1 = arith.constant 0 : i32
    return %c0_i32, %c0_i32_0 : i32, i32
  }
  func.func @transform_8(%arg0: i32) -> (i32, i32) {
    %c0_i32 = arith.constant 0 : i32
    %c0_i32_0 = arith.constant 0 : i32
    %c0_i32_1 = arith.constant 0 : i32
    return %c0_i32, %c0_i32_0 : i32, i32
  }
  func.func @transform_9(%arg0: i32) -> (i32, i32) {
    %c0_i32 = arith.constant 0 : i32
    %c0_i32_0 = arith.constant 0 : i32
    %c0_i32_1 = arith.constant 0 : i32
    return %c0_i32, %c0_i32_0 : i32, i32
  }
  func.func @transform_10(%arg0: i32) -> (i32, i32) {
    %c0_i32 = arith.constant 0 : i32
    %c0_i32_0 = arith.constant 0 : i32
    %c0_i32_1 = arith.constant 0 : i32
    return %c0_i32, %c0_i32_0 : i32, i32
  }
  func.func @transform_11(%arg0: i32) -> (i32, i32) {
    %c0_i32 = arith.constant 0 : i32
    %c0_i32_0 = arith.constant 0 : i32
    %c0_i32_1 = arith.constant 0 : i32
    return %c0_i32, %c0_i32_0 : i32, i32
  }
  func.func @transform_12(%arg0: i32) -> (i32, i32) {
    %c0_i32 = arith.constant 0 : i32
    %c0_i32_0 = arith.constant 0 : i32
    %c0_i32_1 = arith.constant 0 : i32
    return %c0_i32, %c0_i32_0 : i32, i32
  }
  func.func @transform_13(%arg0: i32) -> (i32, i32, i32) {
    %c0_i32 = arith.constant 0 : i32
    %c0_i32_0 = arith.constant 0 : i32
    %c0_i32_1 = arith.constant 0 : i32
    return %arg0, %c0_i32, %c0_i32_0 : i32, i32, i32
  }
}

</mosaic_0001>

<llo_original>
// kernel: tpu_custom_call.1
$region0: #{tpu_custom_call.1}
  #allocation0 [shape = 'u32[]', space=smem, size = 0x4, offset = 0x4, fixed_abs, tag = 'smem constant byte address 0x4 - core index']
  #allocation1 [shape = 'u32[144,128]{1,0:T(1,128)}', space=vmem, size = 0x12000, scoped, tag = 'internal scratch']
  %s0 = inlined_call_operand.vmem [shape: f32[32,128], index: 0, kind: input, shape index: {}]
  %s1 = inlined_call_operand.vmem [shape: f32[1,128], index: 1, kind: input, shape index: {}]
  %s2 = inlined_call_operand.vmem [shape: f32[1,128], index: 2, kind: input, shape index: {}]
  %s3 = inlined_call_operand.vmem [shape: f32[32,224], index: 3, kind: input, shape index: {}]
  %s4 = inlined_call_operand.vmem [shape: f32[32,1], index: 4, kind: input, shape index: {}]
  %s5 = inlined_call_operand.vmem [shape: f32[32,224], index: 5, kind: input, shape index: {}]
  %s6 = inlined_call_operand.vmem [shape: f32[32,1], index: 6, kind: input, shape index: {}]
  %s7 = inlined_call_operand.vmem [shape: f32[128,8], index: 7, kind: input, shape index: {}]
  %s8 = inlined_call_operand.vmem [shape: f32[128,8], index: 8, kind: input, shape index: {}]
  %s9 = inlined_call_operand.vmem [shape: f32[32,64], index: 9, kind: input, shape index: {}]
  %s10 = inlined_call_operand.vmem [shape: f32[32,1], index: 10, kind: input, shape index: {}]
  %s11 = inlined_call_operand.vmem [shape: f32[11,32], index: 11, kind: input, shape index: {}]
  %s12 = inlined_call_operand.vmem [shape: f32[11,1], index: 12, kind: input, shape index: {}]
  %s13 = inlined_call_operand.vmem [shape: f32[1,11,8], index: 13, kind: output, shape index: {}]
  %s14 = sld [smem:[#allocation0]]
  $region62: #{tpu_custom_call.1} parent=0
    _
  %s16 = ssub.s32 1, %s14
  %s17 = scalar_select 0, %s16, %s14
  // Predicated region
  $region2: #{tpu_custom_call.1} parent=0 // pred_check
    _
  $region3: #{tpu_custom_call.1} parent=0 // pred_check_branch
    %19 = sbr.rel (0) target = $region5
  $region4: #{tpu_custom_call.1} parent=0 // pred_region
    _
  $region5: #{tpu_custom_call.1} parent=0 // pred_fallthru
    _
  // Predicated region
  $region6: #{tpu_custom_call.1} parent=0 // pred_check
    _
  $region7: #{tpu_custom_call.1} parent=0 // pred_check_branch
    %21 = sbr.rel (0) target = $region9
  $region8: #{tpu_custom_call.1} parent=0 // pred_region
    _
  $region9: #{tpu_custom_call.1} parent=0 // pred_fallthru
    _
  // Predicated region
  $region10: #{tpu_custom_call.1} parent=0 // pred_check
    _
  $region11: #{tpu_custom_call.1} parent=0 // pred_check_branch
    %23 = sbr.rel (0) target = $region13
  $region12: #{tpu_custom_call.1} parent=0 // pred_region
    _
  $region13: #{tpu_custom_call.1} parent=0 // pred_fallthru
    _
  // Predicated region
  $region14: #{tpu_custom_call.1} parent=0 // pred_check
    _
  $region15: #{tpu_custom_call.1} parent=0 // pred_check_branch
    %25 = sbr.rel (0) target = $region17
  $region16: #{tpu_custom_call.1} parent=0 // pred_region
    _
  $region17: #{tpu_custom_call.1} parent=0 // pred_fallthru
    _
  // Predicated region
  $region18: #{tpu_custom_call.1} parent=0 // pred_check
    _
  $region19: #{tpu_custom_call.1} parent=0 // pred_check_branch
    %27 = sbr.rel (0) target = $region21
  $region20: #{tpu_custom_call.1} parent=0 // pred_region
    _
  $region21: #{tpu_custom_call.1} parent=0 // pred_fallthru
    _
  // Predicated region
  $region22: #{tpu_custom_call.1} parent=0 // pred_check
    _
  $region23: #{tpu_custom_call.1} parent=0 // pred_check_branch
    %29 = sbr.rel (0) target = $region25
  $region24: #{tpu_custom_call.1} parent=0 // pred_region
    _
  $region25: #{tpu_custom_call.1} parent=0 // pred_fallthru
    _
  // Predicated region
  $region26: #{tpu_custom_call.1} parent=0 // pred_check
    _
  $region27: #{tpu_custom_call.1} parent=0 // pred_check_branch
    %31 = sbr.rel (0) target = $region29
  $region28: #{tpu_custom_call.1} parent=0 // pred_region
    _
  $region29: #{tpu_custom_call.1} parent=0 // pred_fallthru
    _
  // Predicated region
  $region30: #{tpu_custom_call.1} parent=0 // pred_check
    _
  $region31: #{tpu_custom_call.1} parent=0 // pred_check_branch
    %33 = sbr.rel (0) target = $region33
  $region32: #{tpu_custom_call.1} parent=0 // pred_region
    _
  $region33: #{tpu_custom_call.1} parent=0 // pred_fallthru
    _
  // Predicated region
  $region34: #{tpu_custom_call.1} parent=0 // pred_check
    _
  $region35: #{tpu_custom_call.1} parent=0 // pred_check_branch
    %35 = sbr.rel (0) target = $region37
  $region36: #{tpu_custom_call.1} parent=0 // pred_region
    _
  $region37: #{tpu_custom_call.1} parent=0 // pred_fallthru
    _
  // Predicated region
  $region38: #{tpu_custom_call.1} parent=0 // pred_check
    _
  $region39: #{tpu_custom_call.1} parent=0 // pred_check_branch
    %37 = sbr.rel (0) target = $region41
  $region40: #{tpu_custom_call.1} parent=0 // pred_region
    _
  $region41: #{tpu_custom_call.1} parent=0 // pred_fallthru
    _
  // Predicated region
  $region42: #{tpu_custom_call.1} parent=0 // pred_check
    _
  $region43: #{tpu_custom_call.1} parent=0 // pred_check_branch
    %39 = sbr.rel (0) target = $region45
  $region44: #{tpu_custom_call.1} parent=0 // pred_region
    _
  $region45: #{tpu_custom_call.1} parent=0 // pred_fallthru
    _
  // Predicated region
  $region46: #{tpu_custom_call.1} parent=0 // pred_check
    _
  $region47: #{tpu_custom_call.1} parent=0 // pred_check_branch
    %41 = sbr.rel (0) target = $region49
  $region48: #{tpu_custom_call.1} parent=0 // pred_region
    _
  $region49: #{tpu_custom_call.1} parent=0 // pred_fallthru
    _
  // Predicated region
  $region50: #{tpu_custom_call.1} parent=0 // pred_check
    _
  $region51: #{tpu_custom_call.1} parent=0 // pred_check_branch
    %43 = sbr.rel (0) target = $region53
  $region52: #{tpu_custom_call.1} parent=0 // pred_region
    _
  $region53: #{tpu_custom_call.1} parent=0 // pred_fallthru
    _
  %v44 = vld [vmem:[%s0] sm:$0xff]
  %v45 = vld [vmem:[%s0 + $0x8] sm:$0xff]
  %v46 = vld [vmem:[%s0 + $0x10] sm:$0xff]
  %v47 = vld [vmem:[%s0 + $0x18] sm:$0xff]
  %v48 = vld [vmem:[%s2] sm:$0x1]
  %v49 = vld [vmem:[%s3] sm:$0xff]
  %v50 = vld [vmem:[%s3 + $0x8] sm:$0xff]
  %v51 = vld [vmem:[%s3 + $0x10] sm:$0xff]
  %v52 = vld [vmem:[%s3 + $0x18] sm:$0xff]
  %v53 = vld [vmem:[%s3 + $0x20] sm:$0xff]
  %v54 = vld [vmem:[%s3 + $0x28] sm:$0xff]
  %v55 = vld [vmem:[%s3 + $0x30] sm:$0xff]
  %v56 = vld [vmem:[%s3 + $0x38] sm:$0xff]
  %61 = vrot.lane.b32.xlu0 %v44, 3
  %v62 = vpop.permute.xlu0 %61
  %63 = vrot.lane.b32.xlu0 %v45, 3
  %v64 = vpop.permute.xlu0 %63
  %65 = vrot.lane.b32.xlu0 %v46, 3
  %v66 = vpop.permute.xlu0 %65
  %67 = vrot.lane.b32.xlu0 %v47, 3
  %v68 = vpop.permute.xlu0 %67
  %vm73 = vcmask 23552
  %v74 = vsel %vm73, 0.0, %v62
  %v75 = vsel %vm73, 0.0, %v64
  %v76 = vsel %vm73, 0.0, %v66
  %v77 = vsel %vm73, 0.0, %v68
  %v78 = vsel %vm73, %v62, 0.0
  %v79 = vsel %vm73, %v64, 0.0
  %v80 = vsel %vm73, %v66, 0.0
  %v81 = vsel %vm73, %v68, 0.0
  %vm82 = vcmp.ge.f32.partialorder %v48, 3.0
  %vm83 = vcmp.lt.f32.partialorder %v48, 19.0
  %vm84 = vmand %vm82, %vm83
  %v85 = vsel %vm84, 1, 0
  %v86 = vlaneseq
  %v87 = vshrl.u32 %v86, 7
  %v88 = vsub.s32 0, %v87
  %v89 = vrot.slane %v85, %v88
  %vm90 = vcmp.eq.s32.totalorder %v89, 1
  %v91 = vsel %vm90, %v74, 0.0
  %v92 = vsel %vm90, %v75, 0.0
  %v93 = vsel %vm90, %v76, 0.0
  %v94 = vsel %vm90, %v77, 0.0
  %vm95 = vcmp.ge.f32.partialorder %v48, 2.0
  %vm96 = vcmp.lt.f32.partialorder %v48, 18.0
  %vm97 = vmand %vm95, %vm96
  %v98 = vsel %vm97, 1, 0
  %v99 = vlaneseq
  %v100 = vshrl.u32 %v99, 7
  %v101 = vsub.s32 0, %v100
  %v102 = vrot.slane %v98, %v101
  %vm103 = vcmp.eq.s32.totalorder %v102, 1
  %112 = vrot.lane.b32.xlu0 %v74, 127
  %v113 = vpop.permute.xlu0 %112
  %114 = vrot.lane.b32.xlu0 %v78, 127
  %v115 = vpop.permute.xlu0 %114
  %116 = vrot.lane.b32.xlu0 %v75, 127
  %v117 = vpop.permute.xlu0 %116
  %118 = vrot.lane.b32.xlu0 %v79, 127
  %v119 = vpop.permute.xlu0 %118
  %120 = vrot.lane.b32.xlu0 %v76, 127
  %v121 = vpop.permute.xlu0 %120
  %122 = vrot.lane.b32.xlu0 %v80, 127
  %v123 = vpop.permute.xlu0 %122
  %124 = vrot.lane.b32.xlu0 %v77, 127
  %v125 = vpop.permute.xlu0 %124
  %126 = vrot.lane.b32.xlu0 %v81, 127
  %v127 = vpop.permute.xlu0 %126
  %vm128 = vcmask 1039360
  %v129 = vsel %vm128, %v113, %v115
  %v130 = vsel %vm128, %v117, %v119
  %v131 = vsel %vm128, %v121, %v123
  %v132 = vsel %vm128, %v125, %v127
  %v137 = vsel %vm103, %v129, 0.0
  %v138 = vsel %vm103, %v130, 0.0
  %v139 = vsel %vm103, %v131, 0.0
  %v140 = vsel %vm103, %v132, 0.0
  %vm141 = vcmp.ge.f32.partialorder %v48, 1.0
  %vm142 = vcmp.lt.f32.partialorder %v48, 17.0
  %vm143 = vmand %vm141, %vm142
  %v144 = vsel %vm143, 1, 0
  %v145 = vlaneseq
  %v146 = vshrl.u32 %v145, 7
  %v147 = vsub.s32 0, %v146
  %v148 = vrot.slane %v144, %v147
  %vm149 = vcmp.eq.s32.totalorder %v148, 1
  %150 = vrot.lane.b32.xlu0 %v74, 126
  %v151 = vpop.permute.xlu0 %150
  %152 = vrot.lane.b32.xlu0 %v78, 126
  %v153 = vpop.permute.xlu0 %152
  %154 = vrot.lane.b32.xlu0 %v75, 126
  %v155 = vpop.permute.xlu0 %154
  %156 = vrot.lane.b32.xlu0 %v79, 126
  %v157 = vpop.permute.xlu0 %156
  %158 = vrot.lane.b32.xlu0 %v76, 126
  %v159 = vpop.permute.xlu0 %158
  %160 = vrot.lane.b32.xlu0 %v80, 126
  %v161 = vpop.permute.xlu0 %160
  %162 = vrot.lane.b32.xlu0 %v77, 126
  %v163 = vpop.permute.xlu0 %162
  %164 = vrot.lane.b32.xlu0 %v81, 126
  %v165 = vpop.permute.xlu0 %164
  %vm166 = vcmask 1031168
  %v167 = vsel %vm166, %v151, %v153
  %v168 = vsel %vm166, %v155, %v157
  %v169 = vsel %vm166, %v159, %v161
  %v170 = vsel %vm166, %v163, %v165
  %v175 = vsel %vm149, %v167, 0.0
  %v176 = vsel %vm149, %v168, 0.0
  %v177 = vsel %vm149, %v169, 0.0
  %v178 = vsel %vm149, %v170, 0.0
  %vm179 = vcmp.ge.f32.partialorder %v48, 0.0
  %vm180 = vcmp.lt.f32.partialorder %v48, 16.0
  %vm181 = vmand %vm179, %vm180
  %v182 = vsel %vm181, 1, 0
  %v183 = vlaneseq
  %v184 = vshrl.u32 %v183, 7
  %v185 = vsub.s32 0, %v184
  %v186 = vrot.slane %v182, %v185
  %vm187 = vcmp.eq.s32.totalorder %v186, 1
  %188 = vrot.lane.b32.xlu0 %v74, 125
  %v189 = vpop.permute.xlu0 %188
  %190 = vrot.lane.b32.xlu0 %v78, 125
  %v191 = vpop.permute.xlu0 %190
  %192 = vrot.lane.b32.xlu0 %v75, 125
  %v193 = vpop.permute.xlu0 %192
  %194 = vrot.lane.b32.xlu0 %v79, 125
  %v195 = vpop.permute.xlu0 %194
  %196 = vrot.lane.b32.xlu0 %v76, 125
  %v197 = vpop.permute.xlu0 %196
  %198 = vrot.lane.b32.xlu0 %v80, 125
  %v199 = vpop.permute.xlu0 %198
  %200 = vrot.lane.b32.xlu0 %v77, 125
  %v201 = vpop.permute.xlu0 %200
  %202 = vrot.lane.b32.xlu0 %v81, 125
  %v203 = vpop.permute.xlu0 %202
  %vm204 = vcmask 1022976
  %v205 = vsel %vm204, %v189, %v191
  %v206 = vsel %vm204, %v193, %v195
  %v207 = vsel %vm204, %v197, %v199
  %v208 = vsel %vm204, %v201, %v203
  %v213 = vsel %vm187, %v205, 0.0
  %v214 = vsel %vm187, %v206, 0.0
  %v215 = vsel %vm187, %v207, 0.0
  %v216 = vsel %vm187, %v208, 0.0
  %vm217 = vcmp.ge.f32.partialorder %v48, -1.0
  %vm218 = vcmp.lt.f32.partialorder %v48, 15.0
  %vm219 = vmand %vm217, %vm218
  %v220 = vsel %vm219, 1, 0
  %v221 = vlaneseq
  %v222 = vshrl.u32 %v221, 7
  %v223 = vsub.s32 0, %v222
  %v224 = vrot.slane %v220, %v223
  %vm225 = vcmp.eq.s32.totalorder %v224, 1
  %226 = vrot.lane.b32.xlu0 %v74, 124
  %v227 = vpop.permute.xlu0 %226
  %228 = vrot.lane.b32.xlu0 %v78, 124
  %v229 = vpop.permute.xlu0 %228
  %230 = vrot.lane.b32.xlu0 %v75, 124
  %v231 = vpop.permute.xlu0 %230
  %232 = vrot.lane.b32.xlu0 %v79, 124
  %v233 = vpop.permute.xlu0 %232
  %234 = vrot.lane.b32.xlu0 %v76, 124
  %v235 = vpop.permute.xlu0 %234
  %236 = vrot.lane.b32.xlu0 %v80, 124
  %v237 = vpop.permute.xlu0 %236
  %238 = vrot.lane.b32.xlu0 %v77, 124
  %v239 = vpop.permute.xlu0 %238
  %240 = vrot.lane.b32.xlu0 %v81, 124
  %v241 = vpop.permute.xlu0 %240
  %vm242 = vcmask 1014784
  %v243 = vsel %vm242, %v227, %v229
  %v244 = vsel %vm242, %v231, %v233
  %v245 = vsel %vm242, %v235, %v237
  %v246 = vsel %vm242, %v239, %v241
  %v251 = vsel %vm225, %v243, 0.0
  %v252 = vsel %vm225, %v244, 0.0
  %v253 = vsel %vm225, %v245, 0.0
  %v254 = vsel %vm225, %v246, 0.0
  %vm255 = vcmp.ge.f32.partialorder %v48, -2.0
  %vm256 = vcmp.lt.f32.partialorder %v48, 14.0
  %vm257 = vmand %vm255, %vm256
  %v258 = vsel %vm257, 1, 0
  %v259 = vlaneseq
  %v260 = vshrl.u32 %v259, 7
  %v261 = vsub.s32 0, %v260
  %v262 = vrot.slane %v258, %v261
  %vm263 = vcmp.eq.s32.totalorder %v262, 1
  %264 = vrot.lane.b32.xlu0 %v74, 123
  %v265 = vpop.permute.xlu0 %264
  %266 = vrot.lane.b32.xlu0 %v78, 123
  %v267 = vpop.permute.xlu0 %266
  %268 = vrot.lane.b32.xlu0 %v75, 123
  %v269 = vpop.permute.xlu0 %268
  %270 = vrot.lane.b32.xlu0 %v79, 123
  %v271 = vpop.permute.xlu0 %270
  %272 = vrot.lane.b32.xlu0 %v76, 123
  %v273 = vpop.permute.xlu0 %272
  %274 = vrot.lane.b32.xlu0 %v80, 123
  %v275 = vpop.permute.xlu0 %274
  %276 = vrot.lane.b32.xlu0 %v77, 123
  %v277 = vpop.permute.xlu0 %276
  %278 = vrot.lane.b32.xlu0 %v81, 123
  %v279 = vpop.permute.xlu0 %278
  %vm280 = vcmask 1006592
  %v281 = vsel %vm280, %v265, %v267
  %v282 = vsel %vm280, %v269, %v271
  %v283 = vsel %vm280, %v273, %v275
  %v284 = vsel %vm280, %v277, %v279
  %v289 = vsel %vm263, %v281, 0.0
  %v290 = vsel %vm263, %v282, 0.0
  %v291 = vsel %vm263, %v283, 0.0
  %v292 = vsel %vm263, %v284, 0.0
  %vm293 = vcmp.ge.f32.partialorder %v48, -3.0
  %vm294 = vcmp.lt.f32.partialorder %v48, 13.0
  %vm295 = vmand %vm293, %vm294
  %v296 = vsel %vm295, 1, 0
  %v297 = vlaneseq
  %v298 = vshrl.u32 %v297, 7
  %v299 = vsub.s32 0, %v298
  %v300 = vrot.slane %v296, %v299
  %vm301 = vcmp.eq.s32.totalorder %v300, 1
  %302 = vrot.lane.b32.xlu0 %v74, 122
  %v303 = vpop.permute.xlu0 %302
  %304 = vrot.lane.b32.xlu0 %v78, 122
  %v305 = vpop.permute.xlu0 %304
  %306 = vrot.lane.b32.xlu0 %v75, 122
  %v307 = vpop.permute.xlu0 %306
  %308 = vrot.lane.b32.xlu0 %v79, 122
  %v309 = vpop.permute.xlu0 %308
  %310 = vrot.lane.b32.xlu0 %v76, 122
  %v311 = vpop.permute.xlu0 %310
  %312 = vrot.lane.b32.xlu0 %v80, 122
  %v313 = vpop.permute.xlu0 %312
  %314 = vrot.lane.b32.xlu0 %v77, 122
  %v315 = vpop.permute.xlu0 %314
  %316 = vrot.lane.b32.xlu0 %v81, 122
  %v317 = vpop.permute.xlu0 %316
  %vm318 = vcmask 998400
  %v319 = vsel %vm318, %v303, %v305
  %v320 = vsel %vm318, %v307, %v309
  %v321 = vsel %vm318, %v311, %v313
  %v322 = vsel %vm318, %v315, %v317
  %v327 = vsel %vm301, %v319, 0.0
  %v328 = vsel %vm301, %v320, 0.0
  %v329 = vsel %vm301, %v321, 0.0
  %v330 = vsel %vm301, %v322, 0.0
  %v331 = vld [vmem:[%s4] sm:$0xff]
  %v332 = vld [vmem:[%s4 + $0x8] sm:$0xff]
  %v333 = vld [vmem:[%s4 + $0x10] sm:$0xff]
  %v334 = vld [vmem:[%s4 + $0x18] sm:$0xff]
  %336 = vset.pattern.permute.xlu0 0
  %337 = vperm.xlu0 %336, %v331
  %v338 = vpop.permute.xlu0 %337
  %341 = vset.pattern.permute.xlu0 0
  %342 = vperm.xlu0 %341, %v332
  %v343 = vpop.permute.xlu0 %342
  %346 = vset.pattern.permute.xlu0 0
  %347 = vperm.xlu0 %346, %v333
  %v348 = vpop.permute.xlu0 %347
  %351 = vset.pattern.permute.xlu0 0
  %352 = vperm.xlu0 %351, %v334
  %v353 = vpop.permute.xlu0 %352
  %vm355 = vcmask 785408
  %v357 = vsel %vm355, %v50, 0
  %v360 = vsel %vm355, %v52, 0
  %v363 = vsel %vm355, %v54, 0
  %v366 = vsel %vm355, %v56, 0
  %368 = vmatprep.subr.mxu0 0.0
  %369 = vmatpush1.msra.mxu0 %v91
  %370 = vmatprep.subr.mxu0 0.0
  %371 = vmatpush1.msra.mxu0 %v92
  %372 = vmatprep.subr.mxu0 0.0
  %373 = vmatpush1.msra.mxu0 %v93
  %374 = vmatprep.subr.mxu0 0.0
  %375 = vmatpush1.msra.mxu0 %v94
  %376 = vmatprep.subr.mxu0 0.0
  %377 = vmatpush1.msra.mxu0 %v137
  %378 = vmatprep.subr.mxu0 0.0
  %379 = vmatpush1.msra.mxu0 %v138
  %380 = vmatprep.subr.mxu0 0.0
  %381 = vmatpush1.msra.mxu0 %v139
  %382 = vmatprep.subr.mxu0 0.0
  %383 = vmatpush1.msra.mxu0 %v140
  %384 = vmatprep.subr.mxu0 0.0
  %385 = vmatpush1.msra.mxu0 %v175
  %386 = vmatprep.subr.mxu0 0.0
  %387 = vmatpush1.msra.mxu0 %v176
  %388 = vmatprep.subr.mxu0 0.0
  %389 = vmatpush1.msra.mxu0 %v177
  %390 = vmatprep.subr.mxu0 0.0
  %391 = vmatpush1.msra.mxu0 %v178
  %392 = vmatprep.subr.mxu0 0.0
  %393 = vmatpush1.msra.mxu0 %v213
  %394 = vmatprep.subr.mxu0 0.0
  %395 = vmatpush1.msra.mxu0 %v214
  %396 = vmatprep.subr.mxu0 0.0
  %397 = vmatpush1.msra.mxu0 %v215
  %398 = vmatprep.subr.mxu0 0.0
  %399 = vmatpush1.msra.mxu0 %v216
  %400 = vmatprep.subr.mxu0 0.0
  %401 = vmatpush1.msra.mxu0 %v251
  %402 = vmatprep.subr.mxu0 0.0
  %403 = vmatpush1.msra.mxu0 %v252
  %404 = vmatprep.subr.mxu0 0.0
  %405 = vmatpush1.msra.mxu0 %v253
  %406 = vmatprep.subr.mxu0 0.0
  %407 = vmatpush1.msra.mxu0 %v254
  %408 = vmatprep.subr.mxu0 0.0
  %409 = vmatpush1.msra.mxu0 %v289
  %410 = vmatprep.subr.mxu0 0.0
  %411 = vmatpush1.msra.mxu0 %v290
  %412 = vmatprep.subr.mxu0 0.0
  %413 = vmatpush1.msra.mxu0 %v291
  %414 = vmatprep.subr.mxu0 0.0
  %415 = vmatpush1.msra.mxu0 %v292
  %416 = vmatprep.subr.mxu0 0.0
  %417 = vmatpush1.msra.mxu0 %v327
  %418 = vmatprep.subr.mxu0 0.0
  %419 = vmatpush1.msra.mxu0 %v328
  %420 = vmatprep.subr.mxu0 0.0
  %421 = vmatpush1.msra.mxu0 %v329
  %422 = vmatprep.subr.mxu0 0.0
  %423 = vmatpush1.msra.mxu0 %v330
  %424 = vmatprep.subr.mxu0 0.0
  %425 = vmatpush1.msra.mxu0 0.0
  %426 = vmatprep.subr.mxu0 0.0
  %427 = vmatpush1.msra.mxu0 0.0
  %428 = vmatprep.subr.mxu0 0.0
  %429 = vmatpush1.msra.mxu0 0.0
  %430 = vmatprep.subr.mxu0 0.0
  %431 = vmatpush1.msra.mxu0 0.0
  %432 = vmatprep.mubr.f32.mxu0 %v357
  %433 = vmatmul.mubr.f32.gmra.mrb[0].mxu0 %v49
  %v434 = vpop.f32.mrb[0].mxu0
  %v435 = vadd.f32 %v338, %v434
  %v436 = vpop.f32.mrb[0].mxu0
  %437 = vmatprep.mubr.f32.mxu0 %v360
  %438 = vmatmul.mubr.f32.gmra.mrb[0].mxu0 %v51
  %v439 = vpop.f32.mrb[0].mxu0
  %v440 = vadd.f32 %v343, %v439
  %v441 = vpop.f32.mrb[0].mxu0
  %442 = vmatprep.mubr.f32.mxu0 %v363
  %443 = vmatmul.mubr.f32.gmra.mrb[0].mxu0 %v53
  %v444 = vpop.f32.mrb[0].mxu0
  %v445 = vadd.f32 %v348, %v444
  %v446 = vpop.f32.mrb[0].mxu0
  %447 = vmatprep.mubr.f32.mxu0 %v366
  %448 = vmatmul.mubr.f32.gmra.mrb[0].mxu0 %v55
  %v449 = vpop.f32.mrb[0].mxu0
  %v450 = vadd.f32 %v353, %v449
  %v451 = vpop.f32.mrb[0].mxu0
  %452 = vdwg.mxu0
  %v453 = vld [vmem:[%s5] sm:$0xff]
  %v454 = vld [vmem:[%s5 + $0x8] sm:$0xff]
  %v455 = vld [vmem:[%s5 + $0x10] sm:$0xff]
  %v456 = vld [vmem:[%s5 + $0x18] sm:$0xff]
  %v457 = vld [vmem:[%s5 + $0x20] sm:$0xff]
  %v458 = vld [vmem:[%s5 + $0x28] sm:$0xff]
  %v459 = vld [vmem:[%s5 + $0x30] sm:$0xff]
  %v460 = vld [vmem:[%s5 + $0x38] sm:$0xff]
  %v461 = vmul.f32 %v44, %v435
  %v462 = vmul.f32 %v45, %v440
  %v463 = vmul.f32 %v46, %v445
  %v464 = vmul.f32 %v47, %v450
  %469 = vrot.lane.b32.xlu0 %v461, 3
  %v470 = vpop.permute.xlu0 %469
  %471 = vrot.lane.b32.xlu0 %v462, 3
  %v472 = vpop.permute.xlu0 %471
  %473 = vrot.lane.b32.xlu0 %v463, 3
  %v474 = vpop.permute.xlu0 %473
  %475 = vrot.lane.b32.xlu0 %v464, 3
  %v476 = vpop.permute.xlu0 %475
  %v481 = vsel %vm73, 0.0, %v470
  %v482 = vsel %vm73, 0.0, %v472
  %v483 = vsel %vm73, 0.0, %v474
  %v484 = vsel %vm73, 0.0, %v476
  %v485 = vsel %vm73, %v470, 0.0
  %v486 = vsel %vm73, %v472, 0.0
  %v487 = vsel %vm73, %v474, 0.0
  %v488 = vsel %vm73, %v476, 0.0
  %v489 = vsel %vm90, %v481, 0.0
  %v490 = vsel %vm90, %v482, 0.0
  %v491 = vsel %vm90, %v483, 0.0
  %v492 = vsel %vm90, %v484, 0.0
  %501 = vrot.lane.b32.xlu0 %v481, 127
  %v502 = vpop.permute.xlu0 %501
  %503 = vrot.lane.b32.xlu0 %v485, 127
  %v504 = vpop.permute.xlu0 %503
  %505 = vrot.lane.b32.xlu0 %v482, 127
  %v506 = vpop.permute.xlu0 %505
  %507 = vrot.lane.b32.xlu0 %v486, 127
  %v508 = vpop.permute.xlu0 %507
  %509 = vrot.lane.b32.xlu0 %v483, 127
  %v510 = vpop.permute.xlu0 %509
  %511 = vrot.lane.b32.xlu0 %v487, 127
  %v512 = vpop.permute.xlu0 %511
  %513 = vrot.lane.b32.xlu0 %v484, 127
  %v514 = vpop.permute.xlu0 %513
  %515 = vrot.lane.b32.xlu0 %v488, 127
  %v516 = vpop.permute.xlu0 %515
  %v517 = vsel %vm128, %v502, %v504
  %v518 = vsel %vm128, %v506, %v508
  %v519 = vsel %vm128, %v510, %v512
  %v520 = vsel %vm128, %v514, %v516
  %v525 = vsel %vm103, %v517, 0.0
  %v526 = vsel %vm103, %v518, 0.0
  %v527 = vsel %vm103, %v519, 0.0
  %v528 = vsel %vm103, %v520, 0.0
  %529 = vrot.lane.b32.xlu0 %v481, 126
  %v530 = vpop.permute.xlu0 %529
  %531 = vrot.lane.b32.xlu0 %v485, 126
  %v532 = vpop.permute.xlu0 %531
  %533 = vrot.lane.b32.xlu0 %v482, 126
  %v534 = vpop.permute.xlu0 %533
  %535 = vrot.lane.b32.xlu0 %v486, 126
  %v536 = vpop.permute.xlu0 %535
  %537 = vrot.lane.b32.xlu0 %v483, 126
  %v538 = vpop.permute.xlu0 %537
  %539 = vrot.lane.b32.xlu0 %v487, 126
  %v540 = vpop.permute.xlu0 %539
  %541 = vrot.lane.b32.xlu0 %v484, 126
  %v542 = vpop.permute.xlu0 %541
  %543 = vrot.lane.b32.xlu0 %v488, 126
  %v544 = vpop.permute.xlu0 %543
  %v545 = vsel %vm166, %v530, %v532
  %v546 = vsel %vm166, %v534, %v536
  %v547 = vsel %vm166, %v538, %v540
  %v548 = vsel %vm166, %v542, %v544
  %v553 = vsel %vm149, %v545, 0.0
  %v554 = vsel %vm149, %v546, 0.0
  %v555 = vsel %vm149, %v547, 0.0
  %v556 = vsel %vm149, %v548, 0.0
  %557 = vrot.lane.b32.xlu0 %v481, 125
  %v558 = vpop.permute.xlu0 %557
  %559 = vrot.lane.b32.xlu0 %v485, 125
  %v560 = vpop.permute.xlu0 %559
  %561 = vrot.lane.b32.xlu0 %v482, 125
  %v562 = vpop.permute.xlu0 %561
  %563 = vrot.lane.b32.xlu0 %v486, 125
  %v564 = vpop.permute.xlu0 %563
  %565 = vrot.lane.b32.xlu0 %v483, 125
  %v566 = vpop.permute.xlu0 %565
  %567 = vrot.lane.b32.xlu0 %v487, 125
  %v568 = vpop.permute.xlu0 %567
  %569 = vrot.lane.b32.xlu0 %v484, 125
  %v570 = vpop.permute.xlu0 %569
  %571 = vrot.lane.b32.xlu0 %v488, 125
  %v572 = vpop.permute.xlu0 %571
  %v573 = vsel %vm204, %v558, %v560
  %v574 = vsel %vm204, %v562, %v564
  %v575 = vsel %vm204, %v566, %v568
  %v576 = vsel %vm204, %v570, %v572
  %v581 = vsel %vm187, %v573, 0.0
  %v582 = vsel %vm187, %v574, 0.0
  %v583 = vsel %vm187, %v575, 0.0
  %v584 = vsel %vm187, %v576, 0.0
  %585 = vrot.lane.b32.xlu0 %v481, 124
  %v586 = vpop.permute.xlu0 %585
  %587 = vrot.lane.b32.xlu0 %v485, 124
  %v588 = vpop.permute.xlu0 %587
  %589 = vrot.lane.b32.xlu0 %v482, 124
  %v590 = vpop.permute.xlu0 %589
  %591 = vrot.lane.b32.xlu0 %v486, 124
  %v592 = vpop.permute.xlu0 %591
  %593 = vrot.lane.b32.xlu0 %v483, 124
  %v594 = vpop.permute.xlu0 %593
  %595 = vrot.lane.b32.xlu0 %v487, 124
  %v596 = vpop.permute.xlu0 %595
  %597 = vrot.lane.b32.xlu0 %v484, 124
  %v598 = vpop.permute.xlu0 %597
  %599 = vrot.lane.b32.xlu0 %v488, 124
  %v600 = vpop.permute.xlu0 %599
  %v601 = vsel %vm242, %v586, %v588
  %v602 = vsel %vm242, %v590, %v592
  %v603 = vsel %vm242, %v594, %v596
  %v604 = vsel %vm242, %v598, %v600
  %v609 = vsel %vm225, %v601, 0.0
  %v610 = vsel %vm225, %v602, 0.0
  %v611 = vsel %vm225, %v603, 0.0
  %v612 = vsel %vm225, %v604, 0.0
  %613 = vrot.lane.b32.xlu0 %v481, 123
  %v614 = vpop.permute.xlu0 %613
  %615 = vrot.lane.b32.xlu0 %v485, 123
  %v616 = vpop.permute.xlu0 %615
  %617 = vrot.lane.b32.xlu0 %v482, 123
  %v618 = vpop.permute.xlu0 %617
  %619 = vrot.lane.b32.xlu0 %v486, 123
  %v620 = vpop.permute.xlu0 %619
  %621 = vrot.lane.b32.xlu0 %v483, 123
  %v622 = vpop.permute.xlu0 %621
  %623 = vrot.lane.b32.xlu0 %v487, 123
  %v624 = vpop.permute.xlu0 %623
  %625 = vrot.lane.b32.xlu0 %v484, 123
  %v626 = vpop.permute.xlu0 %625
  %627 = vrot.lane.b32.xlu0 %v488, 123
  %v628 = vpop.permute.xlu0 %627
  %v629 = vsel %vm280, %v614, %v616
  %v630 = vsel %vm280, %v618, %v620
  %v631 = vsel %vm280, %v622, %v624
  %v632 = vsel %vm280, %v626, %v628
  %v637 = vsel %vm263, %v629, 0.0
  %v638 = vsel %vm263, %v630, 0.0
  %v639 = vsel %vm263, %v631, 0.0
  %v640 = vsel %vm263, %v632, 0.0
  %641 = vrot.lane.b32.xlu0 %v481, 122
  %v642 = vpop.permute.xlu0 %641
  %643 = vrot.lane.b32.xlu0 %v485, 122
  %v644 = vpop.permute.xlu0 %643
  %645 = vrot.lane.b32.xlu0 %v482, 122
  %v646 = vpop.permute.xlu0 %645
  %647 = vrot.lane.b32.xlu0 %v486, 122
  %v648 = vpop.permute.xlu0 %647
  %649 = vrot.lane.b32.xlu0 %v483, 122
  %v650 = vpop.permute.xlu0 %649
  %651 = vrot.lane.b32.xlu0 %v487, 122
  %v652 = vpop.permute.xlu0 %651
  %653 = vrot.lane.b32.xlu0 %v484, 122
  %v654 = vpop.permute.xlu0 %653
  %655 = vrot.lane.b32.xlu0 %v488, 122
  %v656 = vpop.permute.xlu0 %655
  %v657 = vsel %vm318, %v642, %v644
  %v658 = vsel %vm318, %v646, %v648
  %v659 = vsel %vm318, %v650, %v652
  %v660 = vsel %vm318, %v654, %v656
  %v665 = vsel %vm301, %v657, 0.0
  %v666 = vsel %vm301, %v658, 0.0
  %v667 = vsel %vm301, %v659, 0.0
  %v668 = vsel %vm301, %v660, 0.0
  %v669 = vld [vmem:[%s6] sm:$0xff]
  %v670 = vld [vmem:[%s6 + $0x8] sm:$0xff]
  %v671 = vld [vmem:[%s6 + $0x10] sm:$0xff]
  %v672 = vld [vmem:[%s6 + $0x18] sm:$0xff]
  %674 = vset.pattern.permute.xlu0 0
  %675 = vperm.xlu0 %674, %v669
  %v676 = vpop.permute.xlu0 %675
  %679 = vset.pattern.permute.xlu0 0
  %680 = vperm.xlu0 %679, %v670
  %v681 = vpop.permute.xlu0 %680
  %684 = vset.pattern.permute.xlu0 0
  %685 = vperm.xlu0 %684, %v671
  %v686 = vpop.permute.xlu0 %685
  %689 = vset.pattern.permute.xlu0 0
  %690 = vperm.xlu0 %689, %v672
  %v691 = vpop.permute.xlu0 %690
  %v694 = vsel %vm355, %v454, 0
  %v697 = vsel %vm355, %v456, 0
  %v700 = vsel %vm355, %v458, 0
  %v703 = vsel %vm355, %v460, 0
  %705 = vmatprep.subr.mxu0 0.0
  %706 = vmatpush1.msra.mxu0 %v489
  %707 = vmatprep.subr.mxu0 0.0
  %708 = vmatpush1.msra.mxu0 %v490
  %709 = vmatprep.subr.mxu0 0.0
  %710 = vmatpush1.msra.mxu0 %v491
  %711 = vmatprep.subr.mxu0 0.0
  %712 = vmatpush1.msra.mxu0 %v492
  %713 = vmatprep.subr.mxu0 0.0
  %714 = vmatpush1.msra.mxu0 %v525
  %715 = vmatprep.subr.mxu0 0.0
  %716 = vmatpush1.msra.mxu0 %v526
  %717 = vmatprep.subr.mxu0 0.0
  %718 = vmatpush1.msra.mxu0 %v527
  %719 = vmatprep.subr.mxu0 0.0
  %720 = vmatpush1.msra.mxu0 %v528
  %721 = vmatprep.subr.mxu0 0.0
  %722 = vmatpush1.msra.mxu0 %v553
  %723 = vmatprep.subr.mxu0 0.0
  %724 = vmatpush1.msra.mxu0 %v554
  %725 = vmatprep.subr.mxu0 0.0
  %726 = vmatpush1.msra.mxu0 %v555
  %727 = vmatprep.subr.mxu0 0.0
  %728 = vmatpush1.msra.mxu0 %v556
  %729 = vmatprep.subr.mxu0 0.0
  %730 = vmatpush1.msra.mxu0 %v581
  %731 = vmatprep.subr.mxu0 0.0
  %732 = vmatpush1.msra.mxu0 %v582
  %733 = vmatprep.subr.mxu0 0.0
  %734 = vmatpush1.msra.mxu0 %v583
  %735 = vmatprep.subr.mxu0 0.0
  %736 = vmatpush1.msra.mxu0 %v584
  %737 = vmatprep.subr.mxu0 0.0
  %738 = vmatpush1.msra.mxu0 %v609
  %739 = vmatprep.subr.mxu0 0.0
  %740 = vmatpush1.msra.mxu0 %v610
  %741 = vmatprep.subr.mxu0 0.0
  %742 = vmatpush1.msra.mxu0 %v611
  %743 = vmatprep.subr.mxu0 0.0
  %744 = vmatpush1.msra.mxu0 %v612
  %745 = vmatprep.subr.mxu0 0.0
  %746 = vmatpush1.msra.mxu0 %v637
  %747 = vmatprep.subr.mxu0 0.0
  %748 = vmatpush1.msra.mxu0 %v638
  %749 = vmatprep.subr.mxu0 0.0
  %750 = vmatpush1.msra.mxu0 %v639
  %751 = vmatprep.subr.mxu0 0.0
  %752 = vmatpush1.msra.mxu0 %v640
  %753 = vmatprep.subr.mxu0 0.0
  %754 = vmatpush1.msra.mxu0 %v665
  %755 = vmatprep.subr.mxu0 0.0
  %756 = vmatpush1.msra.mxu0 %v666
  %757 = vmatprep.subr.mxu0 0.0
  %758 = vmatpush1.msra.mxu0 %v667
  %759 = vmatprep.subr.mxu0 0.0
  %760 = vmatpush1.msra.mxu0 %v668
  %761 = vmatprep.subr.mxu0 0.0
  %762 = vmatpush1.msra.mxu0 0.0
  %763 = vmatprep.subr.mxu0 0.0
  %764 = vmatpush1.msra.mxu0 0.0
  %765 = vmatprep.subr.mxu0 0.0
  %766 = vmatpush1.msra.mxu0 0.0
  %767 = vmatprep.subr.mxu0 0.0
  %768 = vmatpush1.msra.mxu0 0.0
  %769 = vmatprep.mubr.f32.mxu0 %v694
  %770 = vmatmul.mubr.f32.gmra.mrb[0].mxu0 %v453
  %v771 = vpop.f32.mrb[0].mxu0
  %v772 = vadd.f32 %v676, %v771
  %v773 = vpop.f32.mrb[0].mxu0
  %774 = vmatprep.mubr.f32.mxu0 %v697
  %775 = vmatmul.mubr.f32.gmra.mrb[0].mxu0 %v455
  %v776 = vpop.f32.mrb[0].mxu0
  %v777 = vadd.f32 %v681, %v776
  %v778 = vpop.f32.mrb[0].mxu0
  %779 = vmatprep.mubr.f32.mxu0 %v700
  %780 = vmatmul.mubr.f32.gmra.mrb[0].mxu0 %v457
  %v781 = vpop.f32.mrb[0].mxu0
  %v782 = vadd.f32 %v686, %v781
  %v783 = vpop.f32.mrb[0].mxu0
  %784 = vmatprep.mubr.f32.mxu0 %v703
  %785 = vmatmul.mubr.f32.gmra.mrb[0].mxu0 %v459
  %v786 = vpop.f32.mrb[0].mxu0
  %v787 = vadd.f32 %v691, %v786
  %v788 = vpop.f32.mrb[0].mxu0
  %789 = vdwg.mxu0
  %v790 = vld [vmem:[%s1] sm:$0x1]
  %vm791 = vcmp.gt.f32.partialorder %v790, 0.0
  %v792 = vsel %vm791, 1, 0
  %v793 = vlaneseq
  %v794 = vshrl.u32 %v793, 7
  %v795 = vsub.s32 0, %v794
  %v796 = vrot.slane %v792, %v795
  %vm797 = vcmp.eq.s32.totalorder %v796, 1
  %v798 = vsel %vm797, %v772, -1e+09
  %v799 = vsel %vm797, %v777, -1e+09
  %v800 = vsel %vm797, %v782, -1e+09
  %v801 = vsel %vm797, %v787, -1e+09
  %806 = vrot.lane.b32.xlu0 %v798, 127
  %v807 = vpop.permute.xlu0 %806
  %808 = vrot.lane.b32.xlu0 %v799, 127
  %v809 = vpop.permute.xlu0 %808
  %810 = vrot.lane.b32.xlu0 %v800, 127
  %v811 = vpop.permute.xlu0 %810
  %812 = vrot.lane.b32.xlu0 %v801, 127
  %v813 = vpop.permute.xlu0 %812
  %v818 = vsel %vm128, %v807, -3e+38
  %v819 = vsel %vm128, %v809, -3e+38
  %v820 = vsel %vm128, %v811, -3e+38
  %v821 = vsel %vm128, %v813, -3e+38
  %822 = vrot.lane.b32.xlu0 %v798, 1
  %v823 = vpop.permute.xlu0 %822
  %824 = vrot.lane.b32.xlu0 %v799, 1
  %v825 = vpop.permute.xlu0 %824
  %826 = vrot.lane.b32.xlu0 %v800, 1
  %v827 = vpop.permute.xlu0 %826
  %828 = vrot.lane.b32.xlu0 %v801, 1
  %v829 = vpop.permute.xlu0 %828
  %vm834 = vcmask 7168
  %v835 = vsel %vm834, -3e+38, %v823
  %v836 = vsel %vm834, -3e+38, %v825
  %v837 = vsel %vm834, -3e+38, %v827
  %v838 = vsel %vm834, -3e+38, %v829
  %v839 = vsel %vm218, 1, 0
  %v840 = vlaneseq
  %v841 = vshrl.u32 %v840, 7
  %v842 = vsub.s32 0, %v841
  %v843 = vrot.slane %v839, %v842
  %vm844 = vcmp.eq.s32.totalorder %v843, 1
  %v845 = vsel %vm844, %v818, -3e+38
  %v846 = vsel %vm844, %v819, -3e+38
  %v847 = vsel %vm844, %v820, -3e+38
  %v848 = vsel %vm844, %v821, -3e+38
  %v849 = vmax.f32 %v798, %v845
  %v850 = vmax.f32 %v799, %v846
  %v851 = vmax.f32 %v800, %v847
  %v852 = vmax.f32 %v801, %v848
  %v853 = vsel %vm141, 1, 0
  %v854 = vlaneseq
  %v855 = vshrl.u32 %v854, 7
  %v856 = vsub.s32 0, %v855
  %v857 = vrot.slane %v853, %v856
  %vm858 = vcmp.eq.s32.totalorder %v857, 1
  %v859 = vsel %vm858, %v835, -3e+38
  %v860 = vsel %vm858, %v836, -3e+38
  %v861 = vsel %vm858, %v837, -3e+38
  %v862 = vsel %vm858, %v838, -3e+38
  %v863 = vmax.f32 %v849, %v859
  %v864 = vmax.f32 %v850, %v860
  %v865 = vmax.f32 %v851, %v861
  %v866 = vmax.f32 %v852, %v862
  %871 = vrot.lane.b32.xlu0 %v863, 126
  %v872 = vpop.permute.xlu0 %871
  %873 = vrot.lane.b32.xlu0 %v864, 126
  %v874 = vpop.permute.xlu0 %873
  %875 = vrot.lane.b32.xlu0 %v865, 126
  %v876 = vpop.permute.xlu0 %875
  %877 = vrot.lane.b32.xlu0 %v866, 126
  %v878 = vpop.permute.xlu0 %877
  %v883 = vsel %vm166, %v872, -3e+38
  %v884 = vsel %vm166, %v874, -3e+38
  %v885 = vsel %vm166, %v876, -3e+38
  %v886 = vsel %vm166, %v878, -3e+38
  %887 = vrot.lane.b32.xlu0 %v863, 2
  %v888 = vpop.permute.xlu0 %887
  %889 = vrot.lane.b32.xlu0 %v864, 2
  %v890 = vpop.permute.xlu0 %889
  %891 = vrot.lane.b32.xlu0 %v865, 2
  %v892 = vpop.permute.xlu0 %891
  %893 = vrot.lane.b32.xlu0 %v866, 2
  %v894 = vpop.permute.xlu0 %893
  %vm899 = vcmask 15360
  %v900 = vsel %vm899, -3e+38, %v888
  %v901 = vsel %vm899, -3e+38, %v890
  %v902 = vsel %vm899, -3e+38, %v892
  %v903 = vsel %vm899, -3e+38, %v894
  %v904 = vsel %vm256, 1, 0
  %v905 = vlaneseq
  %v906 = vshrl.u32 %v905, 7
  %v907 = vsub.s32 0, %v906
  %v908 = vrot.slane %v904, %v907
  %vm909 = vcmp.eq.s32.totalorder %v908, 1
  %v910 = vsel %vm909, %v883, -3e+38
  %v911 = vsel %vm909, %v884, -3e+38
  %v912 = vsel %vm909, %v885, -3e+38
  %v913 = vsel %vm909, %v886, -3e+38
  %v914 = vmax.f32 %v863, %v910
  %v915 = vmax.f32 %v864, %v911
  %v916 = vmax.f32 %v865, %v912
  %v917 = vmax.f32 %v866, %v913
  %v918 = vsel %vm95, 1, 0
  %v919 = vlaneseq
  %v920 = vshrl.u32 %v919, 7
  %v921 = vsub.s32 0, %v920
  %v922 = vrot.slane %v918, %v921
  %vm923 = vcmp.eq.s32.totalorder %v922, 1
  %v924 = vsel %vm923, %v900, -3e+38
  %v925 = vsel %vm923, %v901, -3e+38
  %v926 = vsel %vm923, %v902, -3e+38
  %v927 = vsel %vm923, %v903, -3e+38
  %v928 = vmax.f32 %v914, %v924
  %v929 = vmax.f32 %v915, %v925
  %v930 = vmax.f32 %v916, %v926
  %v931 = vmax.f32 %v917, %v927
  %936 = vrot.lane.b32.xlu0 %v928, 124
  %v937 = vpop.permute.xlu0 %936
  %938 = vrot.lane.b32.xlu0 %v929, 124
  %v939 = vpop.permute.xlu0 %938
  %940 = vrot.lane.b32.xlu0 %v930, 124
  %v941 = vpop.permute.xlu0 %940
  %942 = vrot.lane.b32.xlu0 %v931, 124
  %v943 = vpop.permute.xlu0 %942
  %v948 = vsel %vm242, %v937, -3e+38
  %v949 = vsel %vm242, %v939, -3e+38
  %v950 = vsel %vm242, %v941, -3e+38
  %v951 = vsel %vm242, %v943, -3e+38
  %952 = vrot.lane.b32.xlu0 %v928, 4
  %v953 = vpop.permute.xlu0 %952
  %954 = vrot.lane.b32.xlu0 %v929, 4
  %v955 = vpop.permute.xlu0 %954
  %956 = vrot.lane.b32.xlu0 %v930, 4
  %v957 = vpop.permute.xlu0 %956
  %958 = vrot.lane.b32.xlu0 %v931, 4
  %v959 = vpop.permute.xlu0 %958
  %vm964 = vcmask 31744
  %v965 = vsel %vm964, -3e+38, %v953
  %v966 = vsel %vm964, -3e+38, %v955
  %v967 = vsel %vm964, -3e+38, %v957
  %v968 = vsel %vm964, -3e+38, %v959
  %vm969 = vcmp.lt.f32.partialorder %v48, 12.0
  %v970 = vsel %vm969, 1, 0
  %v971 = vlaneseq
  %v972 = vshrl.u32 %v971, 7
  %v973 = vsub.s32 0, %v972
  %v974 = vrot.slane %v970, %v973
  %vm975 = vcmp.eq.s32.totalorder %v974, 1
  %v976 = vsel %vm975, %v948, -3e+38
  %v977 = vsel %vm975, %v949, -3e+38
  %v978 = vsel %vm975, %v950, -3e+38
  %v979 = vsel %vm975, %v951, -3e+38
  %v980 = vmax.f32 %v928, %v976
  %v981 = vmax.f32 %v929, %v977
  %v982 = vmax.f32 %v930, %v978
  %v983 = vmax.f32 %v931, %v979
  %vm984 = vcmp.ge.f32.partialorder %v48, 4.0
  %v985 = vsel %vm984, 1, 0
  %v986 = vlaneseq
  %v987 = vshrl.u32 %v986, 7
  %v988 = vsub.s32 0, %v987
  %v989 = vrot.slane %v985, %v988
  %vm990 = vcmp.eq.s32.totalorder %v989, 1
  %v991 = vsel %vm990, %v965, -3e+38
  %v992 = vsel %vm990, %v966, -3e+38
  %v993 = vsel %vm990, %v967, -3e+38
  %v994 = vsel %vm990, %v968, -3e+38
  %v995 = vmax.f32 %v980, %v991
  %v996 = vmax.f32 %v981, %v992
  %v997 = vmax.f32 %v982, %v993
  %v998 = vmax.f32 %v983, %v994
  %1003 = vrot.lane.b32.xlu0 %v995, 120
  %v1004 = vpop.permute.xlu0 %1003
  %1005 = vrot.lane.b32.xlu0 %v996, 120
  %v1006 = vpop.permute.xlu0 %1005
  %1007 = vrot.lane.b32.xlu0 %v997, 120
  %v1008 = vpop.permute.xlu0 %1007
  %1009 = vrot.lane.b32.xlu0 %v998, 120
  %v1010 = vpop.permute.xlu0 %1009
  %vm1015 = vcmask 982016
  %v1016 = vsel %vm1015, %v1004, -3e+38
  %v1017 = vsel %vm1015, %v1006, -3e+38
  %v1018 = vsel %vm1015, %v1008, -3e+38
  %v1019 = vsel %vm1015, %v1010, -3e+38
  %1020 = vrot.lane.b32.xlu0 %v995, 8
  %v1021 = vpop.permute.xlu0 %1020
  %1022 = vrot.lane.b32.xlu0 %v996, 8
  %v1023 = vpop.permute.xlu0 %1022
  %1024 = vrot.lane.b32.xlu0 %v997, 8
  %v1025 = vpop.permute.xlu0 %1024
  %1026 = vrot.lane.b32.xlu0 %v998, 8
  %v1027 = vpop.permute.xlu0 %1026
  %vm1032 = vcmask 64512
  %v1033 = vsel %vm1032, -3e+38, %v1021
  %v1034 = vsel %vm1032, -3e+38, %v1023
  %v1035 = vsel %vm1032, -3e+38, %v1025
  %v1036 = vsel %vm1032, -3e+38, %v1027
  %vm1037 = vcmp.lt.f32.partialorder %v48, 8.0
  %v1038 = vsel %vm1037, 1, 0
  %v1039 = vlaneseq
  %v1040 = vshrl.u32 %v1039, 7
  %v1041 = vsub.s32 0, %v1040
  %v1042 = vrot.slane %v1038, %v1041
  %vm1043 = vcmp.eq.s32.totalorder %v1042, 1
  %v1044 = vsel %vm1043, %v1016, -3e+38
  %v1045 = vsel %vm1043, %v1017, -3e+38
  %v1046 = vsel %vm1043, %v1018, -3e+38
  %v1047 = vsel %vm1043, %v1019, -3e+38
  %v1048 = vmax.f32 %v995, %v1044
  %v1049 = vmax.f32 %v996, %v1045
  %v1050 = vmax.f32 %v997, %v1046
  %v1051 = vmax.f32 %v998, %v1047
  %vm1052 = vcmp.ge.f32.partialorder %v48, 8.0
  %v1053 = vsel %vm1052, 1, 0
  %v1054 = vlaneseq
  %v1055 = vshrl.u32 %v1054, 7
  %v1056 = vsub.s32 0, %v1055
  %v1057 = vrot.slane %v1053, %v1056
  %vm1058 = vcmp.eq.s32.totalorder %v1057, 1
  %v1059 = vsel %vm1058, %v1033, -3e+38
  %v1060 = vsel %vm1058, %v1034, -3e+38
  %v1061 = vsel %vm1058, %v1035, -3e+38
  %v1062 = vsel %vm1058, %v1036, -3e+38
  %v1063 = vmax.f32 %v1048, %v1059
  %v1064 = vmax.f32 %v1049, %v1060
  %v1065 = vmax.f32 %v1050, %v1061
  %v1066 = vmax.f32 %v1051, %v1062
  %v1067 = vsub.f32 %v798, %v1063
  %v1068 = vsub.f32 %v799, %v1064
  %v1069 = vsub.f32 %v800, %v1065
  %v1070 = vsub.f32 %v801, %v1066
  %v1071 = vmul.f32 %v1067, 1.442695
  %v1072 = vpow.pop %v1071
  %v1073 = vmul.f32 %v1068, 1.442695
  %v1074 = vpow.pop %v1073
  %v1075 = vmul.f32 %v1069, 1.442695
  %v1076 = vpow.pop %v1075
  %v1077 = vmul.f32 %v1070, 1.442695
  %v1078 = vpow.pop %v1077
  %v1079 = vmul.f32 %v435, %v1072
  %v1080 = vmul.f32 %v440, %v1074
  %v1081 = vmul.f32 %v445, %v1076
  %v1082 = vmul.f32 %v450, %v1078
  %v1083 = vld [vmem:[%s7] sm:$0xff]
  %v1084 = vld [vmem:[%s7 + $0x8] sm:$0xff]
  %v1085 = vld [vmem:[%s7 + $0x10] sm:$0xff]
  %v1086 = vld [vmem:[%s7 + $0x18] sm:$0xff]
  %v1087 = vld [vmem:[%s7 + $0x20] sm:$0xff]
  %v1088 = vld [vmem:[%s7 + $0x28] sm:$0xff]
  %v1089 = vld [vmem:[%s7 + $0x30] sm:$0xff]
  %v1090 = vld [vmem:[%s7 + $0x38] sm:$0xff]
  %v1091 = vld [vmem:[%s7 + $0x40] sm:$0xff]
  %v1092 = vld [vmem:[%s7 + $0x48] sm:$0xff]
  %v1093 = vld [vmem:[%s7 + $0x50] sm:$0xff]
  %v1094 = vld [vmem:[%s7 + $0x58] sm:$0xff]
  %v1095 = vld [vmem:[%s7 + $0x60] sm:$0xff]
  %v1096 = vld [vmem:[%s7 + $0x68] sm:$0xff]
  %v1097 = vld [vmem:[%s7 + $0x70] sm:$0xff]
  %v1098 = vld [vmem:[%s7 + $0x78] sm:$0xff]
  %1099 = vmatprep.subr.mxu0 0.0
  %1100 = vmatpush1.msra.mxu0 %v1083
  %1101 = vmatprep.subr.mxu0 0.0
  %1102 = vmatpush1.msra.mxu0 %v1084
  %1103 = vmatprep.subr.mxu0 0.0
  %1104 = vmatpush1.msra.mxu0 %v1085
  %1105 = vmatprep.subr.mxu0 0.0
  %1106 = vmatpush1.msra.mxu0 %v1086
  %1107 = vmatprep.subr.mxu0 0.0
  %1108 = vmatpush1.msra.mxu0 %v1087
  %1109 = vmatprep.subr.mxu0 0.0
  %1110 = vmatpush1.msra.mxu0 %v1088
  %1111 = vmatprep.subr.mxu0 0.0
  %1112 = vmatpush1.msra.mxu0 %v1089
  %1113 = vmatprep.subr.mxu0 0.0
  %1114 = vmatpush1.msra.mxu0 %v1090
  %1115 = vmatprep.subr.mxu0 0.0
  %1116 = vmatpush1.msra.mxu0 %v1091
  %1117 = vmatprep.subr.mxu0 0.0
  %1118 = vmatpush1.msra.mxu0 %v1092
  %1119 = vmatprep.subr.mxu0 0.0
  %1120 = vmatpush1.msra.mxu0 %v1093
  %1121 = vmatprep.subr.mxu0 0.0
  %1122 = vmatpush1.msra.mxu0 %v1094
  %1123 = vmatprep.subr.mxu0 0.0
  %1124 = vmatpush1.msra.mxu0 %v1095
  %1125 = vmatprep.subr.mxu0 0.0
  %1126 = vmatpush1.msra.mxu0 %v1096
  %1127 = vmatprep.subr.mxu0 0.0
  %1128 = vmatpush1.msra.mxu0 %v1097
  %1129 = vmatprep.subr.mxu0 0.0
  %1130 = vmatpush1.msra.mxu0 %v1098
  %1131 = vmatprep.subr.mxu0 0.0
  %1132 = vmatpush1.msra.mxu0 0.0
  %1133 = vmatprep.subr.mxu0 0.0
  %1134 = vmatpush1.msra.mxu0 0.0
  %1135 = vmatprep.subr.mxu0 0.0
  %1136 = vmatpush1.msra.mxu0 0.0
  %1137 = vmatprep.subr.mxu0 0.0
  %1138 = vmatpush1.msra.mxu0 0.0
  %1139 = vmatprep.subr.mxu0 0.0
  %1140 = vmatpush1.msra.mxu0 0.0
  %1141 = vmatprep.subr.mxu0 0.0
  %1142 = vmatpush1.msra.mxu0 0.0
  %1143 = vmatprep.subr.mxu0 0.0
  %1144 = vmatpush1.msra.mxu0 0.0
  %1145 = vmatprep.subr.mxu0 0.0
  %1146 = vmatpush1.msra.mxu0 0.0
  %1147 = vmatprep.subr.mxu0 0.0
  %1148 = vmatpush1.msra.mxu0 0.0
  %1149 = vmatprep.subr.mxu0 0.0
  %1150 = vmatpush1.msra.mxu0 0.0
  %1151 = vmatprep.subr.mxu0 0.0
  %1152 = vmatpush1.msra.mxu0 0.0
  %1153 = vmatprep.subr.mxu0 0.0
  %1154 = vmatpush1.msra.mxu0 0.0
  %1155 = vmatprep.subr.mxu0 0.0
  %1156 = vmatpush1.msra.mxu0 0.0
  %1157 = vmatprep.subr.mxu0 0.0
  %1158 = vmatpush1.msra.mxu0 0.0
  %1159 = vmatprep.subr.mxu0 0.0
  %1160 = vmatpush1.msra.mxu0 0.0
  %1161 = vmatprep.subr.mxu0 0.0
  %1162 = vmatpush1.msra.mxu0 0.0
  %1163 = vmatprep.mubr.f32.mxu0 0.0
  %1164 = vmatmul.mubr.f32.gmra.mrb[0].mxu0 %v1079
  %v1165 = vpop.f32.mrb[0].mxu0
  %v1166 = vadd.f32 0.0, %v1165
  %v1167 = vpop.f32.mrb[0].mxu0
  %1168 = vmatprep.mubr.f32.mxu0 0.0
  %1169 = vmatmul.mubr.f32.gmra.mrb[0].mxu0 %v1080
  %v1170 = vpop.f32.mrb[0].mxu0
  %v1171 = vadd.f32 0.0, %v1170
  %v1172 = vpop.f32.mrb[0].mxu0
  %1173 = vmatprep.mubr.f32.mxu0 0.0
  %1174 = vmatmul.mubr.f32.gmra.mrb[0].mxu0 %v1081
  %v1175 = vpop.f32.mrb[0].mxu0
  %v1176 = vadd.f32 0.0, %v1175
  %v1177 = vpop.f32.mrb[0].mxu0
  %1178 = vmatprep.mubr.f32.mxu0 0.0
  %1179 = vmatmul.mubr.f32.gmra.mrb[0].mxu0 %v1082
  %v1180 = vpop.f32.mrb[0].mxu0
  %v1181 = vadd.f32 0.0, %v1180
  %v1182 = vpop.f32.mrb[0].mxu0
  %1183 = vdwg.mxu0
  %1184 = vmatprep.subr.mxu0 0.0
  %1185 = vmatpush1.msra.mxu0 %v1083
  %1186 = vmatprep.subr.mxu0 0.0
  %1187 = vmatpush1.msra.mxu0 %v1084
  %1188 = vmatprep.subr.mxu0 0.0
  %1189 = vmatpush1.msra.mxu0 %v1085
  %1190 = vmatprep.subr.mxu0 0.0
  %1191 = vmatpush1.msra.mxu0 %v1086
  %1192 = vmatprep.subr.mxu0 0.0
  %1193 = vmatpush1.msra.mxu0 %v1087
  %1194 = vmatprep.subr.mxu0 0.0
  %1195 = vmatpush1.msra.mxu0 %v1088
  %1196 = vmatprep.subr.mxu0 0.0
  %1197 = vmatpush1.msra.mxu0 %v1089
  %1198 = vmatprep.subr.mxu0 0.0
  %1199 = vmatpush1.msra.mxu0 %v1090
  %1200 = vmatprep.subr.mxu0 0.0
  %1201 = vmatpush1.msra.mxu0 %v1091
  %1202 = vmatprep.subr.mxu0 0.0
  %1203 = vmatpush1.msra.mxu0 %v1092
  %1204 = vmatprep.subr.mxu0 0.0
  %1205 = vmatpush1.msra.mxu0 %v1093
  %1206 = vmatprep.subr.mxu0 0.0
  %1207 = vmatpush1.msra.mxu0 %v1094
  %1208 = vmatprep.subr.mxu0 0.0
  %1209 = vmatpush1.msra.mxu0 %v1095
  %1210 = vmatprep.subr.mxu0 0.0
  %1211 = vmatpush1.msra.mxu0 %v1096
  %1212 = vmatprep.subr.mxu0 0.0
  %1213 = vmatpush1.msra.mxu0 %v1097
  %1214 = vmatprep.subr.mxu0 0.0
  %1215 = vmatpush1.msra.mxu0 %v1098
  %1216 = vmatprep.subr.mxu0 0.0
  %1217 = vmatpush1.msra.mxu0 0.0
  %1218 = vmatprep.subr.mxu0 0.0
  %1219 = vmatpush1.msra.mxu0 0.0
  %1220 = vmatprep.subr.mxu0 0.0
  %1221 = vmatpush1.msra.mxu0 0.0
  %1222 = vmatprep.subr.mxu0 0.0
  %1223 = vmatpush1.msra.mxu0 0.0
  %1224 = vmatprep.subr.mxu0 0.0
  %1225 = vmatpush1.msra.mxu0 0.0
  %1226 = vmatprep.subr.mxu0 0.0
  %1227 = vmatpush1.msra.mxu0 0.0
  %1228 = vmatprep.subr.mxu0 0.0
  %1229 = vmatpush1.msra.mxu0 0.0
  %1230 = vmatprep.subr.mxu0 0.0
  %1231 = vmatpush1.msra.mxu0 0.0
  %1232 = vmatprep.subr.mxu0 0.0
  %1233 = vmatpush1.msra.mxu0 0.0
  %1234 = vmatprep.subr.mxu0 0.0
  %1235 = vmatpush1.msra.mxu0 0.0
  %1236 = vmatprep.subr.mxu0 0.0
  %1237 = vmatpush1.msra.mxu0 0.0
  %1238 = vmatprep.subr.mxu0 0.0
  %1239 = vmatpush1.msra.mxu0 0.0
  %1240 = vmatprep.subr.mxu0 0.0
  %1241 = vmatpush1.msra.mxu0 0.0
  %1242 = vmatprep.subr.mxu0 0.0
  %1243 = vmatpush1.msra.mxu0 0.0
  %1244 = vmatprep.subr.mxu0 0.0
  %1245 = vmatpush1.msra.mxu0 0.0
  %1246 = vmatprep.subr.mxu0 0.0
  %1247 = vmatpush1.msra.mxu0 0.0
  %1248 = vmatprep.mubr.f32.mxu0 0.0
  %1249 = vmatmul.mubr.f32.gmra.mrb[0].mxu0 %v1072
  %v1250 = vpop.f32.mrb[0].mxu0
  %v1251 = vadd.f32 0.0, %v1250
  %v1252 = vpop.f32.mrb[0].mxu0
  %1253 = vmatprep.mubr.f32.mxu0 0.0
  %1254 = vmatmul.mubr.f32.gmra.mrb[0].mxu0 %v1074
  %v1255 = vpop.f32.mrb[0].mxu0
  %v1256 = vadd.f32 0.0, %v1255
  %v1257 = vpop.f32.mrb[0].mxu0
  %1258 = vmatprep.mubr.f32.mxu0 0.0
  %1259 = vmatmul.mubr.f32.gmra.mrb[0].mxu0 %v1076
  %v1260 = vpop.f32.mrb[0].mxu0
  %v1261 = vadd.f32 0.0, %v1260
  %v1262 = vpop.f32.mrb[0].mxu0
  %1263 = vmatprep.mubr.f32.mxu0 0.0
  %1264 = vmatmul.mubr.f32.gmra.mrb[0].mxu0 %v1078
  %v1265 = vpop.f32.mrb[0].mxu0
  %v1266 = vadd.f32 0.0, %v1265
  %v1267 = vpop.f32.mrb[0].mxu0
  %1268 = vdwg.mxu0
  %v1269 = vrcp.pop %v1251
  %v1270 = vmul.f32 %v1166, %v1269
  %v1271 = vrcp.pop %v1256
  %v1272 = vmul.f32 %v1171, %v1271
  %v1273 = vrcp.pop %v1261
  %v1274 = vmul.f32 %v1176, %v1273
  %v1275 = vrcp.pop %v1266
  %v1276 = vmul.f32 %v1181, %v1275
  %1281 = vrot.lane.b32.xlu0 %v435, 127
  %v1282 = vpop.permute.xlu0 %1281
  %1283 = vrot.lane.b32.xlu0 %v440, 127
  %v1284 = vpop.permute.xlu0 %1283
  %1285 = vrot.lane.b32.xlu0 %v445, 127
  %v1286 = vpop.permute.xlu0 %1285
  %1287 = vrot.lane.b32.xlu0 %v450, 127
  %v1288 = vpop.permute.xlu0 %1287
  %v1293 = vsel %vm128, %v1282, -3e+38
  %v1294 = vsel %vm128, %v1284, -3e+38
  %v1295 = vsel %vm128, %v1286, -3e+38
  %v1296 = vsel %vm128, %v1288, -3e+38
  %1297 = vrot.lane.b32.xlu0 %v435, 1
  %v1298 = vpop.permute.xlu0 %1297
  %1299 = vrot.lane.b32.xlu0 %v440, 1
  %v1300 = vpop.permute.xlu0 %1299
  %1301 = vrot.lane.b32.xlu0 %v445, 1
  %v1302 = vpop.permute.xlu0 %1301
  %1303 = vrot.lane.b32.xlu0 %v450, 1
  %v1304 = vpop.permute.xlu0 %1303
  %v1309 = vsel %vm834, -3e+38, %v1298
  %v1310 = vsel %vm834, -3e+38, %v1300
  %v1311 = vsel %vm834, -3e+38, %v1302
  %v1312 = vsel %vm834, -3e+38, %v1304
  %v1313 = vsel %vm844, %v1293, -3e+38
  %v1314 = vsel %vm844, %v1294, -3e+38
  %v1315 = vsel %vm844, %v1295, -3e+38
  %v1316 = vsel %vm844, %v1296, -3e+38
  %v1317 = vmax.f32 %v435, %v1313
  %v1318 = vmax.f32 %v440, %v1314
  %v1319 = vmax.f32 %v445, %v1315
  %v1320 = vmax.f32 %v450, %v1316
  %v1321 = vsel %vm858, %v1309, -3e+38
  %v1322 = vsel %vm858, %v1310, -3e+38
  %v1323 = vsel %vm858, %v1311, -3e+38
  %v1324 = vsel %vm858, %v1312, -3e+38
  %v1325 = vmax.f32 %v1317, %v1321
  %v1326 = vmax.f32 %v1318, %v1322
  %v1327 = vmax.f32 %v1319, %v1323
  %v1328 = vmax.f32 %v1320, %v1324
  %1333 = vrot.lane.b32.xlu0 %v1325, 126
  %v1334 = vpop.permute.xlu0 %1333
  %1335 = vrot.lane.b32.xlu0 %v1326, 126
  %v1336 = vpop.permute.xlu0 %1335
  %1337 = vrot.lane.b32.xlu0 %v1327, 126
  %v1338 = vpop.permute.xlu0 %1337
  %1339 = vrot.lane.b32.xlu0 %v1328, 126
  %v1340 = vpop.permute.xlu0 %1339
  %v1345 = vsel %vm166, %v1334, -3e+38
  %v1346 = vsel %vm166, %v1336, -3e+38
  %v1347 = vsel %vm166, %v1338, -3e+38
  %v1348 = vsel %vm166, %v1340, -3e+38
  %1349 = vrot.lane.b32.xlu0 %v1325, 2
  %v1350 = vpop.permute.xlu0 %1349
  %1351 = vrot.lane.b32.xlu0 %v1326, 2
  %v1352 = vpop.permute.xlu0 %1351
  %1353 = vrot.lane.b32.xlu0 %v1327, 2
  %v1354 = vpop.permute.xlu0 %1353
  %1355 = vrot.lane.b32.xlu0 %v1328, 2
  %v1356 = vpop.permute.xlu0 %1355
  %v1361 = vsel %vm899, -3e+38, %v1350
  %v1362 = vsel %vm899, -3e+38, %v1352
  %v1363 = vsel %vm899, -3e+38, %v1354
  %v1364 = vsel %vm899, -3e+38, %v1356
  %v1365 = vsel %vm909, %v1345, -3e+38
  %v1366 = vsel %vm909, %v1346, -3e+38
  %v1367 = vsel %vm909, %v1347, -3e+38
  %v1368 = vsel %vm909, %v1348, -3e+38
  %v1369 = vmax.f32 %v1325, %v1365
  %v1370 = vmax.f32 %v1326, %v1366
  %v1371 = vmax.f32 %v1327, %v1367
  %v1372 = vmax.f32 %v1328, %v1368
  %v1373 = vsel %vm923, %v1361, -3e+38
  %v1374 = vsel %vm923, %v1362, -3e+38
  %v1375 = vsel %vm923, %v1363, -3e+38
  %v1376 = vsel %vm923, %v1364, -3e+38
  %v1377 = vmax.f32 %v1369, %v1373
  %v1378 = vmax.f32 %v1370, %v1374
  %v1379 = vmax.f32 %v1371, %v1375
  %v1380 = vmax.f32 %v1372, %v1376
  %1385 = vrot.lane.b32.xlu0 %v1377, 124
  %v1386 = vpop.permute.xlu0 %1385
  %1387 = vrot.lane.b32.xlu0 %v1378, 124
  %v1388 = vpop.permute.xlu0 %1387
  %1389 = vrot.lane.b32.xlu0 %v1379, 124
  %v1390 = vpop.permute.xlu0 %1389
  %1391 = vrot.lane.b32.xlu0 %v1380, 124
  %v1392 = vpop.permute.xlu0 %1391
  %v1397 = vsel %vm242, %v1386, -3e+38
  %v1398 = vsel %vm242, %v1388, -3e+38
  %v1399 = vsel %vm242, %v1390, -3e+38
  %v1400 = vsel %vm242, %v1392, -3e+38
  %1401 = vrot.lane.b32.xlu0 %v1377, 4
  %v1402 = vpop.permute.xlu0 %1401
  %1403 = vrot.lane.b32.xlu0 %v1378, 4
  %v1404 = vpop.permute.xlu0 %1403
  %1405 = vrot.lane.b32.xlu0 %v1379, 4
  %v1406 = vpop.permute.xlu0 %1405
  %1407 = vrot.lane.b32.xlu0 %v1380, 4
  %v1408 = vpop.permute.xlu0 %1407
  %v1413 = vsel %vm964, -3e+38, %v1402
  %v1414 = vsel %vm964, -3e+38, %v1404
  %v1415 = vsel %vm964, -3e+38, %v1406
  %v1416 = vsel %vm964, -3e+38, %v1408
  %v1417 = vsel %vm975, %v1397, -3e+38
  %v1418 = vsel %vm975, %v1398, -3e+38
  %v1419 = vsel %vm975, %v1399, -3e+38
  %v1420 = vsel %vm975, %v1400, -3e+38
  %v1421 = vmax.f32 %v1377, %v1417
  %v1422 = vmax.f32 %v1378, %v1418
  %v1423 = vmax.f32 %v1379, %v1419
  %v1424 = vmax.f32 %v1380, %v1420
  %v1425 = vsel %vm990, %v1413, -3e+38
  %v1426 = vsel %vm990, %v1414, -3e+38
  %v1427 = vsel %vm990, %v1415, -3e+38
  %v1428 = vsel %vm990, %v1416, -3e+38
  %v1429 = vmax.f32 %v1421, %v1425
  %v1430 = vmax.f32 %v1422, %v1426
  %v1431 = vmax.f32 %v1423, %v1427
  %v1432 = vmax.f32 %v1424, %v1428
  %1437 = vrot.lane.b32.xlu0 %v1429, 120
  %v1438 = vpop.permute.xlu0 %1437
  %1439 = vrot.lane.b32.xlu0 %v1430, 120
  %v1440 = vpop.permute.xlu0 %1439
  %1441 = vrot.lane.b32.xlu0 %v1431, 120
  %v1442 = vpop.permute.xlu0 %1441
  %1443 = vrot.lane.b32.xlu0 %v1432, 120
  %v1444 = vpop.permute.xlu0 %1443
  %v1449 = vsel %vm1015, %v1438, -3e+38
  %v1450 = vsel %vm1015, %v1440, -3e+38
  %v1451 = vsel %vm1015, %v1442, -3e+38
  %v1452 = vsel %vm1015, %v1444, -3e+38
  %1453 = vrot.lane.b32.xlu0 %v1429, 8
  %v1454 = vpop.permute.xlu0 %1453
  %1455 = vrot.lane.b32.xlu0 %v1430, 8
  %v1456 = vpop.permute.xlu0 %1455
  %1457 = vrot.lane.b32.xlu0 %v1431, 8
  %v1458 = vpop.permute.xlu0 %1457
  %1459 = vrot.lane.b32.xlu0 %v1432, 8
  %v1460 = vpop.permute.xlu0 %1459
  %v1465 = vsel %vm1032, -3e+38, %v1454
  %v1466 = vsel %vm1032, -3e+38, %v1456
  %v1467 = vsel %vm1032, -3e+38, %v1458
  %v1468 = vsel %vm1032, -3e+38, %v1460
  %v1469 = vsel %vm1043, %v1449, -3e+38
  %v1470 = vsel %vm1043, %v1450, -3e+38
  %v1471 = vsel %vm1043, %v1451, -3e+38
  %v1472 = vsel %vm1043, %v1452, -3e+38
  %v1473 = vmax.f32 %v1429, %v1469
  %v1474 = vmax.f32 %v1430, %v1470
  %v1475 = vmax.f32 %v1431, %v1471
  %v1476 = vmax.f32 %v1432, %v1472
  %v1477 = vsel %vm1058, %v1465, -3e+38
  %v1478 = vsel %vm1058, %v1466, -3e+38
  %v1479 = vsel %vm1058, %v1467, -3e+38
  %v1480 = vsel %vm1058, %v1468, -3e+38
  %v1481 = vmax.f32 %v1473, %v1477
  %v1482 = vmax.f32 %v1474, %v1478
  %v1483 = vmax.f32 %v1475, %v1479
  %v1484 = vmax.f32 %v1476, %v1480
  %v1485 = vld [vmem:[%s8] sm:$0xff]
  %v1486 = vld [vmem:[%s8 + $0x8] sm:$0xff]
  %v1487 = vld [vmem:[%s8 + $0x10] sm:$0xff]
  %v1488 = vld [vmem:[%s8 + $0x18] sm:$0xff]
  %v1489 = vld [vmem:[%s8 + $0x20] sm:$0xff]
  %v1490 = vld [vmem:[%s8 + $0x28] sm:$0xff]
  %v1491 = vld [vmem:[%s8 + $0x30] sm:$0xff]
  %v1492 = vld [vmem:[%s8 + $0x38] sm:$0xff]
  %v1493 = vld [vmem:[%s8 + $0x40] sm:$0xff]
  %v1494 = vld [vmem:[%s8 + $0x48] sm:$0xff]
  %v1495 = vld [vmem:[%s8 + $0x50] sm:$0xff]
  %v1496 = vld [vmem:[%s8 + $0x58] sm:$0xff]
  %v1497 = vld [vmem:[%s8 + $0x60] sm:$0xff]
  %v1498 = vld [vmem:[%s8 + $0x68] sm:$0xff]
  %v1499 = vld [vmem:[%s8 + $0x70] sm:$0xff]
  %v1500 = vld [vmem:[%s8 + $0x78] sm:$0xff]
  %1501 = vmatprep.subr.mxu0 0.0
  %1502 = vmatpush1.msra.mxu0 %v1485
  %1503 = vmatprep.subr.mxu0 0.0
  %1504 = vmatpush1.msra.mxu0 %v1486
  %1505 = vmatprep.subr.mxu0 0.0
  %1506 = vmatpush1.msra.mxu0 %v1487
  %1507 = vmatprep.subr.mxu0 0.0
  %1508 = vmatpush1.msra.mxu0 %v1488
  %1509 = vmatprep.subr.mxu0 0.0
  %1510 = vmatpush1.msra.mxu0 %v1489
  %1511 = vmatprep.subr.mxu0 0.0
  %1512 = vmatpush1.msra.mxu0 %v1490
  %1513 = vmatprep.subr.mxu0 0.0
  %1514 = vmatpush1.msra.mxu0 %v1491
  %1515 = vmatprep.subr.mxu0 0.0
  %1516 = vmatpush1.msra.mxu0 %v1492
  %1517 = vmatprep.subr.mxu0 0.0
  %1518 = vmatpush1.msra.mxu0 %v1493
  %1519 = vmatprep.subr.mxu0 0.0
  %1520 = vmatpush1.msra.mxu0 %v1494
  %1521 = vmatprep.subr.mxu0 0.0
  %1522 = vmatpush1.msra.mxu0 %v1495
  %1523 = vmatprep.subr.mxu0 0.0
  %1524 = vmatpush1.msra.mxu0 %v1496
  %1525 = vmatprep.subr.mxu0 0.0
  %1526 = vmatpush1.msra.mxu0 %v1497
  %1527 = vmatprep.subr.mxu0 0.0
  %1528 = vmatpush1.msra.mxu0 %v1498
  %1529 = vmatprep.subr.mxu0 0.0
  %1530 = vmatpush1.msra.mxu0 %v1499
  %1531 = vmatprep.subr.mxu0 0.0
  %1532 = vmatpush1.msra.mxu0 %v1500
  %1533 = vmatprep.subr.mxu0 0.0
  %1534 = vmatpush1.msra.mxu0 0.0
  %1535 = vmatprep.subr.mxu0 0.0
  %1536 = vmatpush1.msra.mxu0 0.0
  %1537 = vmatprep.subr.mxu0 0.0
  %1538 = vmatpush1.msra.mxu0 0.0
  %1539 = vmatprep.subr.mxu0 0.0
  %1540 = vmatpush1.msra.mxu0 0.0
  %1541 = vmatprep.subr.mxu0 0.0
  %1542 = vmatpush1.msra.mxu0 0.0
  %1543 = vmatprep.subr.mxu0 0.0
  %1544 = vmatpush1.msra.mxu0 0.0
  %1545 = vmatprep.subr.mxu0 0.0
  %1546 = vmatpush1.msra.mxu0 0.0
  %1547 = vmatprep.subr.mxu0 0.0
  %1548 = vmatpush1.msra.mxu0 0.0
  %1549 = vmatprep.subr.mxu0 0.0
  %1550 = vmatpush1.msra.mxu0 0.0
  %1551 = vmatprep.subr.mxu0 0.0
  %1552 = vmatpush1.msra.mxu0 0.0
  %1553 = vmatprep.subr.mxu0 0.0
  %1554 = vmatpush1.msra.mxu0 0.0
  %1555 = vmatprep.subr.mxu0 0.0
  %1556 = vmatpush1.msra.mxu0 0.0
  %1557 = vmatprep.subr.mxu0 0.0
  %1558 = vmatpush1.msra.mxu0 0.0
  %1559 = vmatprep.subr.mxu0 0.0
  %1560 = vmatpush1.msra.mxu0 0.0
  %1561 = vmatprep.subr.mxu0 0.0
  %1562 = vmatpush1.msra.mxu0 0.0
  %1563 = vmatprep.subr.mxu0 0.0
  %1564 = vmatpush1.msra.mxu0 0.0
  %1565 = vmatprep.mubr.f32.mxu0 0.0
  %1566 = vmatmul.mubr.f32.gmra.mrb[0].mxu0 %v1481
  %v1567 = vpop.f32.mrb[0].mxu0
  %v1568 = vadd.f32 0.0, %v1567
  %v1569 = vpop.f32.mrb[0].mxu0
  %1570 = vmatprep.mubr.f32.mxu0 0.0
  %1571 = vmatmul.mubr.f32.gmra.mrb[0].mxu0 %v1482
  %v1572 = vpop.f32.mrb[0].mxu0
  %v1573 = vadd.f32 0.0, %v1572
  %v1574 = vpop.f32.mrb[0].mxu0
  %1575 = vmatprep.mubr.f32.mxu0 0.0
  %1576 = vmatmul.mubr.f32.gmra.mrb[0].mxu0 %v1483
  %v1577 = vpop.f32.mrb[0].mxu0
  %v1578 = vadd.f32 0.0, %v1577
  %v1579 = vpop.f32.mrb[0].mxu0
  %1580 = vmatprep.mubr.f32.mxu0 0.0
  %1581 = vmatmul.mubr.f32.gmra.mrb[0].mxu0 %v1484
  %v1582 = vpop.f32.mrb[0].mxu0
  %v1583 = vadd.f32 0.0, %v1582
  %v1584 = vpop.f32.mrb[0].mxu0
  %1585 = vdwg.mxu0
  %v1586 = vld [vmem:[%s9] sm:$0xff]
  %v1587 = vld [vmem:[%s9 + $0x8] sm:$0xff]
  %v1588 = vld [vmem:[%s9 + $0x10] sm:$0xff]
  %v1589 = vld [vmem:[%s9 + $0x18] sm:$0xff]
  %v1590 = vld [vmem:[%s10] sm:$0xff]
  %v1591 = vld [vmem:[%s10 + $0x8] sm:$0xff]
  %v1592 = vld [vmem:[%s10 + $0x10] sm:$0xff]
  %v1593 = vld [vmem:[%s10 + $0x18] sm:$0xff]
  %1595 = vset.pattern.permute.xlu0 0
  %1596 = vperm.xlu0 %1595, %v1590
  %v1597 = vpop.permute.xlu0 %1596
  %1600 = vset.pattern.permute.xlu0 0
  %1601 = vperm.xlu0 %1600, %v1591
  %v1602 = vpop.permute.xlu0 %1601
  %1605 = vset.pattern.permute.xlu0 0
  %1606 = vperm.xlu0 %1605, %v1592
  %v1607 = vpop.permute.xlu0 %1606
  %1610 = vset.pattern.permute.xlu0 0
  %1611 = vperm.xlu0 %1610, %v1593
  %v1612 = vpop.permute.xlu0 %1611
  %vm1614 = vcmask 523264
  %v1616 = vsel %vm1614, %v1586, 0
  %v1619 = vsel %vm1614, %v1587, 0
  %v1622 = vsel %vm1614, %v1588, 0
  %v1625 = vsel %vm1614, %v1589, 0
  %1627 = vmatprep.subr.mxu0 0.0
  %1628 = vmatpush1.msra.mxu0 %v1270
  %1629 = vmatprep.subr.mxu0 0.0
  %1630 = vmatpush1.msra.mxu0 %v1272
  %1631 = vmatprep.subr.mxu0 0.0
  %1632 = vmatpush1.msra.mxu0 %v1274
  %1633 = vmatprep.subr.mxu0 0.0
  %1634 = vmatpush1.msra.mxu0 %v1276
  %1635 = vmatprep.subr.mxu0 0.0
  %1636 = vmatpush1.msra.mxu0 %v1568
  %1637 = vmatprep.subr.mxu0 0.0
  %1638 = vmatpush1.msra.mxu0 %v1573
  %1639 = vmatprep.subr.mxu0 0.0
  %1640 = vmatpush1.msra.mxu0 %v1578
  %1641 = vmatprep.subr.mxu0 0.0
  %1642 = vmatpush1.msra.mxu0 %v1583
  %1643 = vmatprep.subr.mxu0 0.0
  %1644 = vmatpush1.msra.mxu0 0.0
  %1645 = vmatprep.subr.mxu0 0.0
  %1646 = vmatpush1.msra.mxu0 0.0
  %1647 = vmatprep.subr.mxu0 0.0
  %1648 = vmatpush1.msra.mxu0 0.0
  %1649 = vmatprep.subr.mxu0 0.0
  %1650 = vmatpush1.msra.mxu0 0.0
  %1651 = vmatprep.subr.mxu0 0.0
  %1652 = vmatpush1.msra.mxu0 0.0
  %1653 = vmatprep.subr.mxu0 0.0
  %1654 = vmatpush1.msra.mxu0 0.0
  %1655 = vmatprep.subr.mxu0 0.0
  %1656 = vmatpush1.msra.mxu0 0.0
  %1657 = vmatprep.subr.mxu0 0.0
  %1658 = vmatpush1.msra.mxu0 0.0
  %1659 = vmatprep.subr.mxu0 0.0
  %1660 = vmatpush1.msra.mxu0 0.0
  %1661 = vmatprep.subr.mxu0 0.0
  %1662 = vmatpush1.msra.mxu0 0.0
  %1663 = vmatprep.subr.mxu0 0.0
  %1664 = vmatpush1.msra.mxu0 0.0
  %1665 = vmatprep.subr.mxu0 0.0
  %1666 = vmatpush1.msra.mxu0 0.0
  %1667 = vmatprep.subr.mxu0 0.0
  %1668 = vmatpush1.msra.mxu0 0.0
  %1669 = vmatprep.subr.mxu0 0.0
  %1670 = vmatpush1.msra.mxu0 0.0
  %1671 = vmatprep.subr.mxu0 0.0
  %1672 = vmatpush1.msra.mxu0 0.0
  %1673 = vmatprep.subr.mxu0 0.0
  %1674 = vmatpush1.msra.mxu0 0.0
  %1675 = vmatprep.subr.mxu0 0.0
  %1676 = vmatpush1.msra.mxu0 0.0
  %1677 = vmatprep.subr.mxu0 0.0
  %1678 = vmatpush1.msra.mxu0 0.0
  %1679 = vmatprep.subr.mxu0 0.0
  %1680 = vmatpush1.msra.mxu0 0.0
  %1681 = vmatprep.subr.mxu0 0.0
  %1682 = vmatpush1.msra.mxu0 0.0
  %1683 = vmatprep.subr.mxu0 0.0
  %1684 = vmatpush1.msra.mxu0 0.0
  %1685 = vmatprep.subr.mxu0 0.0
  %1686 = vmatpush1.msra.mxu0 0.0
  %1687 = vmatprep.subr.mxu0 0.0
  %1688 = vmatpush1.msra.mxu0 0.0
  %1689 = vmatprep.subr.mxu0 0.0
  %1690 = vmatpush1.msra.mxu0 0.0
  %1691 = vmatprep.mubr.f32.mxu0 0.0
  %1692 = vmatmul.mubr.f32.gmra.mrb[0].mxu0 %v1616
  %v1693 = vpop.f32.mrb[0].mxu0
  %v1694 = vadd.f32 %v1597, %v1693
  %v1695 = vpop.f32.mrb[0].mxu0
  %1696 = vmatprep.mubr.f32.mxu0 0.0
  %1697 = vmatmul.mubr.f32.gmra.mrb[0].mxu0 %v1619
  %v1698 = vpop.f32.mrb[0].mxu0
  %v1699 = vadd.f32 %v1602, %v1698
  %v1700 = vpop.f32.mrb[0].mxu0
  %1701 = vmatprep.mubr.f32.mxu0 0.0
  %1702 = vmatmul.mubr.f32.gmra.mrb[0].mxu0 %v1622
  %v1703 = vpop.f32.mrb[0].mxu0
  %v1704 = vadd.f32 %v1607, %v1703
  %v1705 = vpop.f32.mrb[0].mxu0
  %1706 = vmatprep.mubr.f32.mxu0 0.0
  %1707 = vmatmul.mubr.f32.gmra.mrb[0].mxu0 %v1625
  %v1708 = vpop.f32.mrb[0].mxu0
  %v1709 = vadd.f32 %v1612, %v1708
  %v1710 = vpop.f32.mrb[0].mxu0
  %1711 = vdwg.mxu0
  %v1712 = vmax.f32 %v1694, 0.0
  %v1713 = vmax.f32 %v1699, 0.0
  %v1714 = vmax.f32 %v1704, 0.0
  %v1715 = vmax.f32 %v1709, 0.0
  %v1716 = vld [vmem:[%s11] sm:$0xff]
  %v1717 = vld [vmem:[%s11 + $0x8] sm:$0x7]
  %v1718 = vld [vmem:[%s12] sm:$0xff]
  %v1719 = vld [vmem:[%s12 + $0x8] sm:$0x7]
  %1721 = vset.pattern.permute.xlu0 0
  %1722 = vperm.xlu0 %1721, %v1718
  %v1723 = vpop.permute.xlu0 %1722
  %1726 = vset.pattern.permute.xlu0 0
  %1727 = vperm.xlu0 %1726, %v1719
  %v1728 = vpop.permute.xlu0 %1727
  %vm1730 = vcmask 261120
  %v1732 = vsel %vm1730, %v1716, 0
  %v1735 = vsel %vm1730, %v1717, 0
  %1737 = vmatprep.subr.mxu0 0.0
  %1738 = vmatpush1.msra.mxu0 %v1712
  %1739 = vmatprep.subr.mxu0 0.0
  %1740 = vmatpush1.msra.mxu0 %v1713
  %1741 = vmatprep.subr.mxu0 0.0
  %1742 = vmatpush1.msra.mxu0 %v1714
  %1743 = vmatprep.subr.mxu0 0.0
  %1744 = vmatpush1.msra.mxu0 %v1715
  %1745 = vmatprep.subr.mxu0 0.0
  %1746 = vmatpush1.msra.mxu0 0.0
  %1747 = vmatprep.subr.mxu0 0.0
  %1748 = vmatpush1.msra.mxu0 0.0
  %1749 = vmatprep.subr.mxu0 0.0
  %1750 = vmatpush1.msra.mxu0 0.0
  %1751 = vmatprep.subr.mxu0 0.0
  %1752 = vmatpush1.msra.mxu0 0.0
  %1753 = vmatprep.subr.mxu0 0.0
  %1754 = vmatpush1.msra.mxu0 0.0
  %1755 = vmatprep.subr.mxu0 0.0
  %1756 = vmatpush1.msra.mxu0 0.0
  %1757 = vmatprep.subr.mxu0 0.0
  %1758 = vmatpush1.msra.mxu0 0.0
  %1759 = vmatprep.subr.mxu0 0.0
  %1760 = vmatpush1.msra.mxu0 0.0
  %1761 = vmatprep.subr.mxu0 0.0
  %1762 = vmatpush1.msra.mxu0 0.0
  %1763 = vmatprep.subr.mxu0 0.0
  %1764 = vmatpush1.msra.mxu0 0.0
  %1765 = vmatprep.subr.mxu0 0.0
  %1766 = vmatpush1.msra.mxu0 0.0
  %1767 = vmatprep.subr.mxu0 0.0
  %1768 = vmatpush1.msra.mxu0 0.0
  %1769 = vmatprep.subr.mxu0 0.0
  %1770 = vmatpush1.msra.mxu0 0.0
  %1771 = vmatprep.subr.mxu0 0.0
  %1772 = vmatpush1.msra.mxu0 0.0
  %1773 = vmatprep.subr.mxu0 0.0
  %1774 = vmatpush1.msra.mxu0 0.0
  %1775 = vmatprep.subr.mxu0 0.0
  %1776 = vmatpush1.msra.mxu0 0.0
  %1777 = vmatprep.subr.mxu0 0.0
  %1778 = vmatpush1.msra.mxu0 0.0
  %1779 = vmatprep.subr.mxu0 0.0
  %1780 = vmatpush1.msra.mxu0 0.0
  %1781 = vmatprep.subr.mxu0 0.0
  %1782 = vmatpush1.msra.mxu0 0.0
  %1783 = vmatprep.subr.mxu0 0.0
  %1784 = vmatpush1.msra.mxu0 0.0
  %1785 = vmatprep.subr.mxu0 0.0
  %1786 = vmatpush1.msra.mxu0 0.0
  %1787 = vmatprep.subr.mxu0 0.0
  %1788 = vmatpush1.msra.mxu0 0.0
  %1789 = vmatprep.subr.mxu0 0.0
  %1790 = vmatpush1.msra.mxu0 0.0
  %1791 = vmatprep.subr.mxu0 0.0
  %1792 = vmatpush1.msra.mxu0 0.0
  %1793 = vmatprep.subr.mxu0 0.0
  %1794 = vmatpush1.msra.mxu0 0.0
  %1795 = vmatprep.subr.mxu0 0.0
  %1796 = vmatpush1.msra.mxu0 0.0
  %1797 = vmatprep.subr.mxu0 0.0
  %1798 = vmatpush1.msra.mxu0 0.0
  %1799 = vmatprep.subr.mxu0 0.0
  %1800 = vmatpush1.msra.mxu0 0.0
  %1801 = vmatprep.mubr.f32.mxu0 0.0
  %1802 = vmatmul.mubr.f32.gmra.mrb[0].mxu0 %v1732
  %v1803 = vpop.f32.mrb[0].mxu0
  %v1804 = vadd.f32 %v1723, %v1803
  %v1805 = vpop.f32.mrb[0].mxu0
  %1806 = vmatprep.mubr.f32.mxu0 0.0
  %1807 = vmatmul.mubr.f32.gmra.mrb[0].mxu0 %v1735
  %v1808 = vpop.f32.mrb[0].mxu0
  %v1809 = vadd.f32 %v1728, %v1808
  %v1810 = vpop.f32.mrb[0].mxu0
  %1811 = vdwg.mxu0
  %1812 = vst.msk [vmem:[%s13] sm:$0xff] %vm1032, %v1804
  %vm1813 = vcmask 59392
  %1814 = vst.msk [vmem:[%s13 + $0x8] sm:$0x7] %vm1813, %v1809
  // Predicated region
  $region54: #{tpu_custom_call.1} parent=0 // pred_check
    _
  $region55: #{tpu_custom_call.1} parent=0 // pred_check_branch
    %1816 = sbr.rel (0) target = $region57
  $region56: #{tpu_custom_call.1} parent=0 // pred_region
    _
  $region57: #{tpu_custom_call.1} parent=0 // pred_fallthru
    _
  // Predicated region
  $region58: #{tpu_custom_call.1} parent=0 // pred_check
    _
  $region59: #{tpu_custom_call.1} parent=0 // pred_check_branch
    %1818 = sbr.rel (0) target = $region61
  $region60: #{tpu_custom_call.1} parent=0 // pred_region
    _
  $region61: #{tpu_custom_call.1} parent=0 // pred_fallthru
    _

</llo_original>
